<compile_context>
chip_gen: v7x
topology: tpu7x:2x2x1
jax: 0.10.0
libtpu: 0.0.40
codegen_flags: <defaults>
</compile_context>

<pallas_src>
import jax
import jax.numpy as jnp
from jax import lax
from jax.experimental import pallas as pl
from jax.experimental.pallas import tpu as pltpu

BN_EPS = 1e-5
LANE = 128
# Layers 1,2,4,5 end in ReLU(True); layer 3 ends in Dropout(p=0.5) (identity in eval).
_RELU = (True, True, False, True, True)


def _mlp_kernel(x_ref, w1, b1, w2, b2, w3, b3, w4, b4, w5, b5, w6, b6, out_ref):
    """One batch tile of the fused (BN-folded) 6-layer MLP."""
    ws = (w1, w2, w3, w4, w5)
    bs = (b1, b2, b3, b4, b5)
    h = x_ref[...]                                        # bf16 [tn, 128]
    for i in range(5):
        a = jnp.dot(h, ws[i][...], preferred_element_type=jnp.float32) + bs[i][...]
        if _RELU[i]:
            a = jnp.maximum(a, 0.0)
        # layer 3's Dropout(p=0.5) is identity in eval mode.
        # TODO(synk): training-mode dropout (pltpu.prng_random_bits mask) not implemented.
        h = a.astype(h.dtype)
    out_ref[...] = (jnp.dot(h, w6[...], preferred_element_type=jnp.float32)
                    + b6[...]).astype(out_ref.dtype)


def _round_up(n, m):
    return (n + m - 1) // m * m


def init_raw_params(key, dims):
    """PyTorch-style params. dims = (in, h1..h5, out). Weights stored [in, out]."""
    layers = []
    keys = jax.random.split(key, (len(dims) - 1) * 2)
    for li in range(len(dims) - 1):
        d_in, d_out = dims[li], dims[li + 1]
        bound = 1.0 / float(d_in) ** 0.5
        w = jax.random.uniform(keys[2 * li], (d_in, d_out), jnp.float32, -bound, bound)
        b = jax.random.uniform(keys[2 * li + 1], (d_out,), jnp.float32, -bound, bound)
        if li < 5:
            f = jnp.arange(d_out, dtype=jnp.float32)
            gamma = 1.0 + 0.01 * f
            beta = 0.05 - 0.002 * f
            mean = 0.1 * jnp.sin(f)
            var = 1.0 + 0.1 * jnp.cos(f) ** 2
            layers.append((w, b, gamma, beta, mean, var))
        else:
            layers.append((w, b))
    return layers


def fold_params(raw_layers, compute_dtype=jnp.bfloat16):
    """Fold eval-mode BN into the preceding Linear; pad layer-1 K and layer-6 N
    to 128 lanes. Returns the flat [w1,b1,...,w6,b6] list the kernel expects."""
    flat = []
    for li, layer in enumerate(raw_layers):
        if li < 5:
            w, b, gamma, beta, mean, var = layer
            scale = gamma * lax.rsqrt(var + BN_EPS)
            w = w * scale[None, :]
            b = (b - mean) * scale + beta
        else:
            w, b = layer
        if li == 0:                                  # zero-pad input features 124 -> 128
            k_pad = _round_up(w.shape[0], LANE)
            w = jnp.pad(w, ((0, k_pad - w.shape[0]), (0, 0)))
        if li == 5:                                  # lane-dense output: pad 3 -> 128
            n_pad = _round_up(w.shape[1], LANE)
            w = jnp.pad(w, ((0, 0), (0, n_pad - w.shape[1])))
            b = jnp.pad(b, (0, n_pad - b.shape[0]))
        flat.append(w.astype(compute_dtype))
        flat.append(b.astype(jnp.float32).reshape(1, -1))
    return flat


def batch_net_forward(x, folded, out_dim, *, tn=256, compute_dtype=jnp.bfloat16):
    n, d_in = x.shape
    k_pad = folded[0].shape[0]        # 128-padded input feature dim
    out_pad = folded[-1].shape[1]     # 128-padded output dim
    tn = min(tn, _round_up(max(n, 1), 8))
    n_pad = _round_up(n, tn)
    x_p = jnp.pad(x.astype(compute_dtype), ((0, n_pad - n), (0, k_pad - d_in)))

    grid = (n_pad // tn,)
    x_spec = pl.BlockSpec((tn, k_pad), lambda i: (i, 0))
    out_spec = pl.BlockSpec((tn, out_pad), lambda i: (i, 0))
    # Weights/biases: constant block index -> VMEM-resident across grid steps.
    param_specs = [pl.BlockSpec(p.shape, lambda i: (0, 0)) for p in folded]

    # Explicit scoped-VMEM budget: resident params + double-buffered x/out tiles + slack.
    param_bytes = sum(int(p.size) * p.dtype.itemsize for p in folded)
    tile_bytes = tn * k_pad * jnp.dtype(compute_dtype).itemsize + tn * out_pad * 4
    vmem_bytes = 2 * (param_bytes + tile_bytes) + (16 << 20)

    out = pl.pallas_call(
        _mlp_kernel,
        grid=grid,
        in_specs=[x_spec] + param_specs,
        out_specs=out_spec,
        out_shape=jax.ShapeDtypeStruct((n_pad, out_pad), jnp.float32),
        compiler_params=pltpu.CompilerParams(
            dimension_semantics=("parallel",),
            vmem_limit_bytes=int(vmem_bytes)),
    )(x_p, *folded)
    return out[:n, :out_dim]


def reference_forward(x, folded, out_dim, compute_dtype=jnp.bfloat16):
    """Pure-JAX mirror of the kernel (same folded/padded bf16 params)."""
    k_pad = folded[0].shape[0]
    h = jnp.pad(x.astype(compute_dtype), ((0, 0), (0, k_pad - x.shape[1])))
    for i in range(5):
        w, b = folded[2 * i], folded[2 * i + 1]
        a = jnp.dot(h, w, preferred_element_type=jnp.float32) + b
        if _RELU[i]:
            a = jnp.maximum(a, 0.0)
        h = a.astype(compute_dtype)
    out = jnp.dot(h, folded[10], preferred_element_type=jnp.float32) + folded[11]
    return out[:, :out_dim]


def reference_forward_f32(x, raw_layers):
    """PyTorch eval-mode semantics in f32 (BN unfolded) for fidelity check."""
    h = x
    for li, layer in enumerate(raw_layers):
        if li < 5:
            w, b, gamma, beta, mean, var = layer
            h = h @ w + b
            h = (h - mean) * lax.rsqrt(var + BN_EPS) * gamma + beta
            if _RELU[li]:
                h = jnp.maximum(h, 0.0)
        else:
            w, b = layer
            h = h @ w + b
    return h


if __name__ == "__main__":
    # in_dim = 121 (color) + thickness + structure + grating = 124; "Full_3p" -> 3 outputs.
    dims = (124, 64, 64, 32, 32, 16, 3)
    batch = 256

    key = jax.random.PRNGKey(0)
    k_x, k_p = jax.random.split(key)
    x = jax.random.normal(k_x, (batch, dims[0]), jnp.float32)

    raw = init_raw_params(k_p, dims)
    folded = fold_params(raw)

    out = batch_net_forward(x, folded, dims[-1], tn=128)
    jax.block_until_ready(out)
    assert out.shape == (batch, dims[-1])

    # Matches the bf16-folded reference closely (same math, same dtypes).
    ref = reference_forward(x, folded, dims[-1])
    assert jnp.allclose(out, ref, rtol=1e-3, atol=1e-3), float(jnp.max(jnp.abs(out - ref)))

    # Loose fidelity check against the unfolded f32 (PyTorch eval-mode) path.
    ref_f32 = reference_forward_f32(x, raw)
    assert jnp.allclose(out, ref_f32, rtol=0.1, atol=0.1), float(jnp.max(jnp.abs(out - ref_f32)))

    print("KERNEL_OK")
</pallas_src>

<mosaic_0001>
module attributes {stable_mosaic.version = 11 : i64} {
  func.func @_mlp_kernel(%arg0: i32, %arg1: memref<128x128xbf16, #tpu.memory_space<vmem>>, %arg2: memref<128x64xbf16, #tpu.memory_space<vmem>>, %arg3: memref<1x64xf32, #tpu.memory_space<vmem>>, %arg4: memref<64x64xbf16, #tpu.memory_space<vmem>>, %arg5: memref<1x64xf32, #tpu.memory_space<vmem>>, %arg6: memref<64x32xbf16, #tpu.memory_space<vmem>>, %arg7: memref<1x32xf32, #tpu.memory_space<vmem>>, %arg8: memref<32x32xbf16, #tpu.memory_space<vmem>>, %arg9: memref<1x32xf32, #tpu.memory_space<vmem>>, %arg10: memref<32x16xbf16, #tpu.memory_space<vmem>>, %arg11: memref<1x16xf32, #tpu.memory_space<vmem>>, %arg12: memref<16x128xbf16, #tpu.memory_space<vmem>>, %arg13: memref<1x128xf32, #tpu.memory_space<vmem>>, %arg14: memref<128x128xf32, #tpu.memory_space<vmem>>) attributes {dimension_semantics = [#tpu.dimension_semantics<parallel>], iteration_bounds = array<i64: 2>, scalar_prefetch = 0 : i64, scratch_operands = 0 : i64, tpu.core_type = #tpu.core_type<tc>, window_params = [{transform_indices = @transform_0, window_bounds = array<i64: 128, 128>}, {pipeline_mode = #tpu.pipeline_mode<synchronous>, transform_indices = @transform_1, window_bounds = array<i64: 128, 64>}, {pipeline_mode = #tpu.pipeline_mode<synchronous>, transform_indices = @transform_2, window_bounds = array<i64: 1, 64>}, {pipeline_mode = #tpu.pipeline_mode<synchronous>, transform_indices = @transform_3, window_bounds = array<i64: 64, 64>}, {pipeline_mode = #tpu.pipeline_mode<synchronous>, transform_indices = @transform_4, window_bounds = array<i64: 1, 64>}, {pipeline_mode = #tpu.pipeline_mode<synchronous>, transform_indices = @transform_5, window_bounds = array<i64: 64, 32>}, {pipeline_mode = #tpu.pipeline_mode<synchronous>, transform_indices = @transform_6, window_bounds = array<i64: 1, 32>}, {pipeline_mode = #tpu.pipeline_mode<synchronous>, transform_indices = @transform_7, window_bounds = array<i64: 32, 32>}, {pipeline_mode = #tpu.pipeline_mode<synchronous>, transform_indices = @transform_8, window_bounds = array<i64: 1, 32>}, {pipeline_mode = #tpu.pipeline_mode<synchronous>, transform_indices = @transform_9, window_bounds = array<i64: 32, 16>}, {pipeline_mode = #tpu.pipeline_mode<synchronous>, transform_indices = @transform_10, window_bounds = array<i64: 1, 16>}, {pipeline_mode = #tpu.pipeline_mode<synchronous>, transform_indices = @transform_11, window_bounds = array<i64: 16, 128>}, {pipeline_mode = #tpu.pipeline_mode<synchronous>, transform_indices = @transform_12, window_bounds = array<i64: 1, 128>}, {transform_indices = @transform_13, window_bounds = array<i64: 128, 128>}]} {
    %c0 = arith.constant 0 : index
    %c0_0 = arith.constant 0 : index
    %0 = vector.load %arg1[%c0, %c0_0] : memref<128x128xbf16, #tpu.memory_space<vmem>>, vector<128x128xbf16>
    %c0_1 = arith.constant 0 : index
    %c0_2 = arith.constant 0 : index
    %1 = vector.load %arg2[%c0_1, %c0_2] : memref<128x64xbf16, #tpu.memory_space<vmem>>, vector<128x64xbf16>
    %cst = arith.constant dense<0.000000e+00> : vector<128x64xf32>
    %2 = tpu.matmul %0, %1, %cst {dimension_numbers = #tpu.dot_dimension_numbers<[1], [0], [0], [1], [0, 0, 1, 1], [], []>} : vector<128x128xbf16>, vector<128x64xbf16>, vector<128x64xf32> -> vector<128x64xf32>
    %c0_3 = arith.constant 0 : index
    %c0_4 = arith.constant 0 : index
    %3 = vector.load %arg3[%c0_3, %c0_4] : memref<1x64xf32, #tpu.memory_space<vmem>>, vector<1x64xf32>
    %4 = vector.broadcast %3 : vector<1x64xf32> to vector<128x64xf32>
    %5 = arith.addf %2, %4 : vector<128x64xf32>
    %cst_5 = arith.constant 0.000000e+00 : f32
    %6 = vector.broadcast %cst_5 : f32 to vector<128x64xf32>
    %7 = arith.maximumf %5, %6 : vector<128x64xf32>
    %8 = arith.truncf %7 : vector<128x64xf32> to vector<128x64xbf16>
    %c0_6 = arith.constant 0 : index
    %c0_7 = arith.constant 0 : index
    %9 = vector.load %arg4[%c0_6, %c0_7] : memref<64x64xbf16, #tpu.memory_space<vmem>>, vector<64x64xbf16>
    %cst_8 = arith.constant dense<0.000000e+00> : vector<128x64xf32>
    %10 = tpu.matmul %8, %9, %cst_8 {dimension_numbers = #tpu.dot_dimension_numbers<[1], [0], [0], [1], [0, 0, 1, 1], [], []>} : vector<128x64xbf16>, vector<64x64xbf16>, vector<128x64xf32> -> vector<128x64xf32>
    %c0_9 = arith.constant 0 : index
    %c0_10 = arith.constant 0 : index
    %11 = vector.load %arg5[%c0_9, %c0_10] : memref<1x64xf32, #tpu.memory_space<vmem>>, vector<1x64xf32>
    %12 = vector.broadcast %11 : vector<1x64xf32> to vector<128x64xf32>
    %13 = arith.addf %10, %12 : vector<128x64xf32>
    %cst_11 = arith.constant 0.000000e+00 : f32
    %14 = vector.broadcast %cst_11 : f32 to vector<128x64xf32>
    %15 = arith.maximumf %13, %14 : vector<128x64xf32>
    %16 = arith.truncf %15 : vector<128x64xf32> to vector<128x64xbf16>
    %c0_12 = arith.constant 0 : index
    %c0_13 = arith.constant 0 : index
    %17 = vector.load %arg6[%c0_12, %c0_13] : memref<64x32xbf16, #tpu.memory_space<vmem>>, vector<64x32xbf16>
    %cst_14 = arith.constant dense<0.000000e+00> : vector<128x32xf32>
    %18 = tpu.matmul %16, %17, %cst_14 {dimension_numbers = #tpu.dot_dimension_numbers<[1], [0], [0], [1], [0, 0, 1, 1], [], []>} : vector<128x64xbf16>, vector<64x32xbf16>, vector<128x32xf32> -> vector<128x32xf32>
    %c0_15 = arith.constant 0 : index
    %c0_16 = arith.constant 0 : index
    %19 = vector.load %arg7[%c0_15, %c0_16] : memref<1x32xf32, #tpu.memory_space<vmem>>, vector<1x32xf32>
    %20 = vector.broadcast %19 : vector<1x32xf32> to vector<128x32xf32>
    %21 = arith.addf %18, %20 : vector<128x32xf32>
    %22 = arith.truncf %21 : vector<128x32xf32> to vector<128x32xbf16>
    %c0_17 = arith.constant 0 : index
    %c0_18 = arith.constant 0 : index
    %23 = vector.load %arg8[%c0_17, %c0_18] : memref<32x32xbf16, #tpu.memory_space<vmem>>, vector<32x32xbf16>
    %cst_19 = arith.constant dense<0.000000e+00> : vector<128x32xf32>
    %24 = tpu.matmul %22, %23, %cst_19 {dimension_numbers = #tpu.dot_dimension_numbers<[1], [0], [0], [1], [0, 0, 1, 1], [], []>} : vector<128x32xbf16>, vector<32x32xbf16>, vector<128x32xf32> -> vector<128x32xf32>
    %c0_20 = arith.constant 0 : index
    %c0_21 = arith.constant 0 : index
    %25 = vector.load %arg9[%c0_20, %c0_21] : memref<1x32xf32, #tpu.memory_space<vmem>>, vector<1x32xf32>
    %26 = vector.broadcast %25 : vector<1x32xf32> to vector<128x32xf32>
    %27 = arith.addf %24, %26 : vector<128x32xf32>
    %cst_22 = arith.constant 0.000000e+00 : f32
    %28 = vector.broadcast %cst_22 : f32 to vector<128x32xf32>
    %29 = arith.maximumf %27, %28 : vector<128x32xf32>
    %30 = arith.truncf %29 : vector<128x32xf32> to vector<128x32xbf16>
    %c0_23 = arith.constant 0 : index
    %c0_24 = arith.constant 0 : index
    %31 = vector.load %arg10[%c0_23, %c0_24] : memref<32x16xbf16, #tpu.memory_space<vmem>>, vector<32x16xbf16>
    %cst_25 = arith.constant dense<0.000000e+00> : vector<128x16xf32>
    %32 = tpu.matmul %30, %31, %cst_25 {dimension_numbers = #tpu.dot_dimension_numbers<[1], [0], [0], [1], [0, 0, 1, 1], [], []>} : vector<128x32xbf16>, vector<32x16xbf16>, vector<128x16xf32> -> vector<128x16xf32>
    %c0_26 = arith.constant 0 : index
    %c0_27 = arith.constant 0 : index
    %33 = vector.load %arg11[%c0_26, %c0_27] : memref<1x16xf32, #tpu.memory_space<vmem>>, vector<1x16xf32>
    %34 = vector.broadcast %33 : vector<1x16xf32> to vector<128x16xf32>
    %35 = arith.addf %32, %34 : vector<128x16xf32>
    %cst_28 = arith.constant 0.000000e+00 : f32
    %36 = vector.broadcast %cst_28 : f32 to vector<128x16xf32>
    %37 = arith.maximumf %35, %36 : vector<128x16xf32>
    %38 = arith.truncf %37 : vector<128x16xf32> to vector<128x16xbf16>
    %c0_29 = arith.constant 0 : index
    %c0_30 = arith.constant 0 : index
    %39 = vector.load %arg12[%c0_29, %c0_30] : memref<16x128xbf16, #tpu.memory_space<vmem>>, vector<16x128xbf16>
    %cst_31 = arith.constant dense<0.000000e+00> : vector<128x128xf32>
    %40 = tpu.matmul %38, %39, %cst_31 {dimension_numbers = #tpu.dot_dimension_numbers<[1], [0], [0], [1], [0, 0, 1, 1], [], []>} : vector<128x16xbf16>, vector<16x128xbf16>, vector<128x128xf32> -> vector<128x128xf32>
    %c0_32 = arith.constant 0 : index
    %c0_33 = arith.constant 0 : index
    %41 = vector.load %arg13[%c0_32, %c0_33] : memref<1x128xf32, #tpu.memory_space<vmem>>, vector<1x128xf32>
    %42 = vector.broadcast %41 : vector<1x128xf32> to vector<128x128xf32>
    %43 = arith.addf %40, %42 : vector<128x128xf32>
    %c0_34 = arith.constant 0 : index
    %c0_35 = arith.constant 0 : index
    %44 = vector.load %arg14[%c0_34, %c0_35] : memref<128x128xf32, #tpu.memory_space<vmem>>, vector<128x128xf32>
    tpu.vector_store %arg14[%c0_34, %c0_35], %43 {strides = array<i32>} : memref<128x128xf32, #tpu.memory_space<vmem>>, vector<128x128xf32>,
    return
  }
  func.func @transform_0(%arg0: i32) -> (i32, i32) {
    %c0_i32 = arith.constant 0 : i32
    %c0_i32_0 = arith.constant 0 : i32
    return %arg0, %c0_i32 : i32, i32
  }
  func.func @transform_1(%arg0: i32) -> (i32, i32) {
    %c0_i32 = arith.constant 0 : i32
    %c0_i32_0 = arith.constant 0 : i32
    %c0_i32_1 = arith.constant 0 : i32
    return %c0_i32, %c0_i32_0 : i32, i32
  }
  func.func @transform_2(%arg0: i32) -> (i32, i32) {
    %c0_i32 = arith.constant 0 : i32
    %c0_i32_0 = arith.constant 0 : i32
    %c0_i32_1 = arith.constant 0 : i32
    return %c0_i32, %c0_i32_0 : i32, i32
  }
  func.func @transform_3(%arg0: i32) -> (i32, i32) {
    %c0_i32 = arith.constant 0 : i32
    %c0_i32_0 = arith.constant 0 : i32
    %c0_i32_1 = arith.constant 0 : i32
    return %c0_i32, %c0_i32_0 : i32, i32
  }
  func.func @transform_4(%arg0: i32) -> (i32, i32) {
    %c0_i32 = arith.constant 0 : i32
    %c0_i32_0 = arith.constant 0 : i32
    %c0_i32_1 = arith.constant 0 : i32
    return %c0_i32, %c0_i32_0 : i32, i32
  }
  func.func @transform_5(%arg0: i32) -> (i32, i32) {
    %c0_i32 = arith.constant 0 : i32
    %c0_i32_0 = arith.constant 0 : i32
    %c0_i32_1 = arith.constant 0 : i32
    return %c0_i32, %c0_i32_0 : i32, i32
  }
  func.func @transform_6(%arg0: i32) -> (i32, i32) {
    %c0_i32 = arith.constant 0 : i32
    %c0_i32_0 = arith.constant 0 : i32
    %c0_i32_1 = arith.constant 0 : i32
    return %c0_i32, %c0_i32_0 : i32, i32
  }
  func.func @transform_7(%arg0: i32) -> (i32, i32) {
    %c0_i32 = arith.constant 0 : i32
    %c0_i32_0 = arith.constant 0 : i32
    %c0_i32_1 = arith.constant 0 : i32
    return %c0_i32, %c0_i32_0 : i32, i32
  }
  func.func @transform_8(%arg0: i32) -> (i32, i32) {
    %c0_i32 = arith.constant 0 : i32
    %c0_i32_0 = arith.constant 0 : i32
    %c0_i32_1 = arith.constant 0 : i32
    return %c0_i32, %c0_i32_0 : i32, i32
  }
  func.func @transform_9(%arg0: i32) -> (i32, i32) {
    %c0_i32 = arith.constant 0 : i32
    %c0_i32_0 = arith.constant 0 : i32
    %c0_i32_1 = arith.constant 0 : i32
    return %c0_i32, %c0_i32_0 : i32, i32
  }
  func.func @transform_10(%arg0: i32) -> (i32, i32) {
    %c0_i32 = arith.constant 0 : i32
    %c0_i32_0 = arith.constant 0 : i32
    %c0_i32_1 = arith.constant 0 : i32
    return %c0_i32, %c0_i32_0 : i32, i32
  }
  func.func @transform_11(%arg0: i32) -> (i32, i32) {
    %c0_i32 = arith.constant 0 : i32
    %c0_i32_0 = arith.constant 0 : i32
    %c0_i32_1 = arith.constant 0 : i32
    return %c0_i32, %c0_i32_0 : i32, i32
  }
  func.func @transform_12(%arg0: i32) -> (i32, i32) {
    %c0_i32 = arith.constant 0 : i32
    %c0_i32_0 = arith.constant 0 : i32
    %c0_i32_1 = arith.constant 0 : i32
    return %c0_i32, %c0_i32_0 : i32, i32
  }
  func.func @transform_13(%arg0: i32) -> (i32, i32) {
    %c0_i32 = arith.constant 0 : i32
    %c0_i32_0 = arith.constant 0 : i32
    return %arg0, %c0_i32 : i32, i32
  }
}

</mosaic_0001>

<llo_original>
// kernel: tpu_custom_call.1
$region0: #{tpu_custom_call.1}
  #allocation0 [shape = 'u32[]', space=smem, size = 0x4, offset = 0x4, fixed_abs, tag = 'smem constant byte address 0x4 - core index']
  #allocation1 [shape = 'u32[144,128]{1,0:T(1,128)}', space=vmem, size = 0x12000, scoped, tag = 'internal scratch']
  %s0 = inlined_call_operand.vmem [shape: bf16[256,128], index: 0, kind: input, shape index: {}]
  %s1 = inlined_call_operand.vmem [shape: bf16[128,64], index: 1, kind: input, shape index: {}]
  %s2 = inlined_call_operand.vmem [shape: f32[1,64], index: 2, kind: input, shape index: {}]
  %s3 = inlined_call_operand.hbm [shape: bf16[64,64], index: 3, kind: input, shape index: {}]
  %s4 = inlined_call_operand.vmem [shape: f32[1,64], index: 4, kind: input, shape index: {}]
  %s5 = inlined_call_operand.vmem [shape: bf16[64,32], index: 5, kind: input, shape index: {}]
  %s6 = inlined_call_operand.hbm [shape: f32[1,32], index: 6, kind: input, shape index: {}]
  %s7 = inlined_call_operand.vmem [shape: bf16[32,32], index: 7, kind: input, shape index: {}]
  %s8 = inlined_call_operand.hbm [shape: f32[1,32], index: 8, kind: input, shape index: {}]
  %s9 = inlined_call_operand.vmem [shape: bf16[32,16], index: 9, kind: input, shape index: {}]
  %s10 = inlined_call_operand.vmem [shape: f32[1,16], index: 10, kind: input, shape index: {}]
  %s11 = inlined_call_operand.vmem [shape: bf16[16,128], index: 11, kind: input, shape index: {}]
  %s12 = inlined_call_operand.vmem [shape: f32[1,128], index: 12, kind: input, shape index: {}]
  %s13 = inlined_call_operand.hbm [shape: f32[256,128], index: 13, kind: output, shape index: {}]
  %s14 = sld [smem:[#allocation0]]
  $region97: #{tpu_custom_call.1} parent=0
    _
  %s16 = ssub.s32 1, %s14
  %s17 = scalar_select 0, %s16, %s14
  $region1: #{tpu_custom_call.1} parent=0
    #allocation2 [shape = 'u8[16384]{0}', space=vmem, size = 0x4000, scoped, tag = 'input window, operand 3, single buffered']
    #allocation3 [shape = 's32[2]{0}', space=sflag, size = 0x8, scoped, tag = 'scoped memory for tpu_custom_call.1']
    #allocation4 [shape = 's32[2]{0}', space=sflag, size = 0x8, scoped, tag = 'scoped memory for tpu_custom_call.1']
    #allocation5 [shape = 'u8[512]{0}', space=vmem, size = 0x400, scoped, tag = 'input window, operand 6, single buffered']
    #allocation6 [shape = 's32[1]{0}', space=sflag, size = 0x4, scoped, tag = 'scoped memory for tpu_custom_call.1']
    #allocation7 [shape = 'u8[512]{0}', space=vmem, size = 0x400, scoped, tag = 'input window, operand 8, single buffered']
    #allocation8 [shape = 'u8[131072]{0}', space=vmem, size = 0x20000, scoped, tag = 'output window, operand 0']
    %18 = vsyncpa [#allocation3], 0
    %19 = vsyncpa [#allocation6], 0
    %20 = vsyncpa [#allocation4], 0
    %s21 = scalar_lea.sflag [#allocation4], 1
    %22 = vsyncpa %s21, 0
    loop: start=0, step=1, limit=4
    $region2: #{tpu_custom_call.1} parent=1 // loop_pre_header
      _
    $region3: #{tpu_custom_call.1} parent=1 // loop_header
      %s24 = sphi 0, %s28
      %p25 = scmp.ge.s32.totalorder %s24, 4
      %s34 = sphi 0, %s36
      %s37 = sphi 0, %s34
      %s38 = sphi 0, %s37
      %s54 = sphi 0, %s38
      %s58 = sphi 0, %s58
      %s60 = sphi 0, %s58
      %s61 = sphi 0, %s60
      %s75 = sphi 0, %s61
      %s79 = sphi 0, %s79
      %s81 = sphi 0, %s79
      %s82 = sphi 0, %s81
      %s96 = sphi 0, %s82
      %s100 = sphi 0, %s100
      %s102 = sphi 0, %s100
      %s103 = sphi 0, %s102
      %s117 = sphi 0, %s103
      %s121 = sphi 0, %s121
      %s123 = sphi 0, %s121
      %s124 = sphi 0, %s123
      %s138 = sphi 0, %s124
      %s142 = sphi 0, %s142
      %s144 = sphi 0, %s142
      %s145 = sphi 0, %s144
      %s159 = sphi 0, %s145
      %s163 = sphi 0, %s163
      %s165 = sphi 0, %s163
      %s166 = sphi 0, %s165
      %s180 = sphi 0, %s166
      %s184 = sphi 0, %s184
      %s186 = sphi 0, %s184
      %s187 = sphi 0, %s186
      %s201 = sphi 0, %s187
      %s205 = sphi 0, %s205
      %s207 = sphi 0, %s205
      %s208 = sphi 0, %s207
      %s222 = sphi 0, %s208
      %s226 = sphi 0, %s226
      %s228 = sphi 0, %s226
      %s229 = sphi 0, %s228
      %s243 = sphi 0, %s229
      %s247 = sphi 0, %s247
      %s249 = sphi 0, %s247
      %s250 = sphi 0, %s249
      %s264 = sphi 0, %s250
      %s268 = sphi 0, %s268
      %s270 = sphi 0, %s268
      %s271 = sphi 0, %s270
      %s285 = sphi 0, %s271
      %s289 = sphi 0, %s289
      %s291 = sphi 0, %s289
      %s292 = sphi 0, %s291
      %s306 = sphi 0, %s292
      %s312 = sphi 0, %s314
      %s315 = sphi 0, %s312
      %s316 = sphi 0, %s315
      %s332 = sphi 0, %s316
    $region4: #{tpu_custom_call.1} parent=1 // loop_header_branch
      %27 = sbr.rel (%p25) target = $region8
    $region5: #{tpu_custom_call.1} parent=1 // loop_body
      %s29 = ssub.s32 %s24, 1
      %s30 = ssub.s32 %s24, 2
      %s31 = sadd.s32 %s24, 1
      %s32 = ssub.s32 %s24, %s31
      %p33 = scmp.eq.s32.totalorder %s32, 0
      %s35 = sadd.s32 %s34, 1
      %s36 = scalar_select %p33, %s34, %s35
      %p39 = pneg %p33
      %p40 = scmp.eq.s32.totalorder %s24, 1
      %p41 = por %p39, %p40
      %p42 = scmp.ne.s32.totalorder %s34, %s37
      %p43 = scmp.eq.s32.totalorder %s24, 0
      %p44 = por %p42, %p43
      %p45 = scmp.ne.s32.totalorder %s34, %s37
      %p46 = scmp.eq.s32.totalorder %s29, 1
      %p47 = por %p45, %p46
      %p48 = scmp.ne.s32.totalorder %s37, %s38
      %p49 = scmp.eq.s32.totalorder %s29, 0
      %p50 = por %p48, %p49
      %p51 = scmp.ne.s32.totalorder %s37, %s38
      %p52 = scmp.eq.s32.totalorder %s30, 1
      %p53 = por %p51, %p52
      %p55 = scmp.ne.s32.totalorder %s38, %s54
      %p56 = scmp.eq.s32.totalorder %s30, 0
      %p57 = por %p55, %p56
      %s59 = sadd.s32 %s58, 1
      %p62 = scmp.eq.s32.totalorder %s24, 1
      %p63 = scmp.ne.s32.totalorder %s58, %s60
      %p64 = scmp.eq.s32.totalorder %s24, 0
      %p65 = por %p63, %p64
      %p66 = scmp.ne.s32.totalorder %s58, %s60
      %p67 = scmp.eq.s32.totalorder %s29, 1
      %p68 = por %p66, %p67
      %p69 = scmp.ne.s32.totalorder %s60, %s61
      %p70 = scmp.eq.s32.totalorder %s29, 0
      %p71 = por %p69, %p70
      %p72 = scmp.ne.s32.totalorder %s60, %s61
      %p73 = scmp.eq.s32.totalorder %s30, 1
      %p74 = por %p72, %p73
      %p76 = scmp.ne.s32.totalorder %s61, %s75
      %p77 = scmp.eq.s32.totalorder %s30, 0
      %p78 = por %p76, %p77
      %s80 = sadd.s32 %s79, 1
      %p83 = scmp.eq.s32.totalorder %s24, 1
      %p84 = scmp.ne.s32.totalorder %s79, %s81
      %p85 = scmp.eq.s32.totalorder %s24, 0
      %p86 = por %p84, %p85
      %p87 = scmp.ne.s32.totalorder %s79, %s81
      %p88 = scmp.eq.s32.totalorder %s29, 1
      %p89 = por %p87, %p88
      %p90 = scmp.ne.s32.totalorder %s81, %s82
      %p91 = scmp.eq.s32.totalorder %s29, 0
      %p92 = por %p90, %p91
      %p93 = scmp.ne.s32.totalorder %s81, %s82
      %p94 = scmp.eq.s32.totalorder %s30, 1
      %p95 = por %p93, %p94
      %p97 = scmp.ne.s32.totalorder %s82, %s96
      %p98 = scmp.eq.s32.totalorder %s30, 0
      %p99 = por %p97, %p98
      %s101 = sadd.s32 %s100, 1
      %p104 = scmp.eq.s32.totalorder %s24, 1
      %p105 = scmp.ne.s32.totalorder %s100, %s102
      %p106 = scmp.eq.s32.totalorder %s24, 0
      %p107 = por %p105, %p106
      %p108 = scmp.ne.s32.totalorder %s100, %s102
      %p109 = scmp.eq.s32.totalorder %s29, 1
      %p110 = por %p108, %p109
      %p111 = scmp.ne.s32.totalorder %s102, %s103
      %p112 = scmp.eq.s32.totalorder %s29, 0
      %p113 = por %p111, %p112
      %p114 = scmp.ne.s32.totalorder %s102, %s103
      %p115 = scmp.eq.s32.totalorder %s30, 1
      %p116 = por %p114, %p115
      %p118 = scmp.ne.s32.totalorder %s103, %s117
      %p119 = scmp.eq.s32.totalorder %s30, 0
      %p120 = por %p118, %p119
      %s122 = sadd.s32 %s121, 1
      %p125 = scmp.eq.s32.totalorder %s24, 1
      %p126 = scmp.ne.s32.totalorder %s121, %s123
      %p127 = scmp.eq.s32.totalorder %s24, 0
      %p128 = por %p126, %p127
      %p129 = scmp.ne.s32.totalorder %s121, %s123
      %p130 = scmp.eq.s32.totalorder %s29, 1
      %p131 = por %p129, %p130
      %p132 = scmp.ne.s32.totalorder %s123, %s124
      %p133 = scmp.eq.s32.totalorder %s29, 0
      %p134 = por %p132, %p133
      %p135 = scmp.ne.s32.totalorder %s123, %s124
      %p136 = scmp.eq.s32.totalorder %s30, 1
      %p137 = por %p135, %p136
      %p139 = scmp.ne.s32.totalorder %s124, %s138
      %p140 = scmp.eq.s32.totalorder %s30, 0
      %p141 = por %p139, %p140
      %s143 = sadd.s32 %s142, 1
      %p146 = scmp.eq.s32.totalorder %s24, 1
      %p147 = scmp.ne.s32.totalorder %s142, %s144
      %p148 = scmp.eq.s32.totalorder %s24, 0
      %p149 = por %p147, %p148
      %p150 = scmp.ne.s32.totalorder %s142, %s144
      %p151 = scmp.eq.s32.totalorder %s29, 1
      %p152 = por %p150, %p151
      %p153 = scmp.ne.s32.totalorder %s144, %s145
      %p154 = scmp.eq.s32.totalorder %s29, 0
      %p155 = por %p153, %p154
      %p156 = scmp.ne.s32.totalorder %s144, %s145
      %p157 = scmp.eq.s32.totalorder %s30, 1
      %p158 = por %p156, %p157
      %p160 = scmp.ne.s32.totalorder %s145, %s159
      %p161 = scmp.eq.s32.totalorder %s30, 0
      %p162 = por %p160, %p161
      %s164 = sadd.s32 %s163, 1
      %p167 = scmp.eq.s32.totalorder %s24, 1
      %p168 = scmp.ne.s32.totalorder %s163, %s165
      %p169 = scmp.eq.s32.totalorder %s24, 0
      %p170 = por %p168, %p169
      %p171 = scmp.ne.s32.totalorder %s163, %s165
      %p172 = scmp.eq.s32.totalorder %s29, 1
      %p173 = por %p171, %p172
      %p174 = scmp.ne.s32.totalorder %s165, %s166
      %p175 = scmp.eq.s32.totalorder %s29, 0
      %p176 = por %p174, %p175
      %p177 = scmp.ne.s32.totalorder %s165, %s166
      %p178 = scmp.eq.s32.totalorder %s30, 1
      %p179 = por %p177, %p178
      %p181 = scmp.ne.s32.totalorder %s166, %s180
      %p182 = scmp.eq.s32.totalorder %s30, 0
      %p183 = por %p181, %p182
      %s185 = sadd.s32 %s184, 1
      %p188 = scmp.eq.s32.totalorder %s24, 1
      %p189 = scmp.ne.s32.totalorder %s184, %s186
      %p190 = scmp.eq.s32.totalorder %s24, 0
      %p191 = por %p189, %p190
      %p192 = scmp.ne.s32.totalorder %s184, %s186
      %p193 = scmp.eq.s32.totalorder %s29, 1
      %p194 = por %p192, %p193
      %p195 = scmp.ne.s32.totalorder %s186, %s187
      %p196 = scmp.eq.s32.totalorder %s29, 0
      %p197 = por %p195, %p196
      %p198 = scmp.ne.s32.totalorder %s186, %s187
      %p199 = scmp.eq.s32.totalorder %s30, 1
      %p200 = por %p198, %p199
      %p202 = scmp.ne.s32.totalorder %s187, %s201
      %p203 = scmp.eq.s32.totalorder %s30, 0
      %p204 = por %p202, %p203
      %s206 = sadd.s32 %s205, 1
      %p209 = scmp.eq.s32.totalorder %s24, 1
      %p210 = scmp.ne.s32.totalorder %s205, %s207
      %p211 = scmp.eq.s32.totalorder %s24, 0
      %p212 = por %p210, %p211
      %p213 = scmp.ne.s32.totalorder %s205, %s207
      %p214 = scmp.eq.s32.totalorder %s29, 1
      %p215 = por %p213, %p214
      %p216 = scmp.ne.s32.totalorder %s207, %s208
      %p217 = scmp.eq.s32.totalorder %s29, 0
      %p218 = por %p216, %p217
      %p219 = scmp.ne.s32.totalorder %s207, %s208
      %p220 = scmp.eq.s32.totalorder %s30, 1
      %p221 = por %p219, %p220
      %p223 = scmp.ne.s32.totalorder %s208, %s222
      %p224 = scmp.eq.s32.totalorder %s30, 0
      %p225 = por %p223, %p224
      %s227 = sadd.s32 %s226, 1
      %p230 = scmp.eq.s32.totalorder %s24, 1
      %p231 = scmp.ne.s32.totalorder %s226, %s228
      %p232 = scmp.eq.s32.totalorder %s24, 0
      %p233 = por %p231, %p232
      %p234 = scmp.ne.s32.totalorder %s226, %s228
      %p235 = scmp.eq.s32.totalorder %s29, 1
      %p236 = por %p234, %p235
      %p237 = scmp.ne.s32.totalorder %s228, %s229
      %p238 = scmp.eq.s32.totalorder %s29, 0
      %p239 = por %p237, %p238
      %p240 = scmp.ne.s32.totalorder %s228, %s229
      %p241 = scmp.eq.s32.totalorder %s30, 1
      %p242 = por %p240, %p241
      %p244 = scmp.ne.s32.totalorder %s229, %s243
      %p245 = scmp.eq.s32.totalorder %s30, 0
      %p246 = por %p244, %p245
      %s248 = sadd.s32 %s247, 1
      %p251 = scmp.eq.s32.totalorder %s24, 1
      %p252 = scmp.ne.s32.totalorder %s247, %s249
      %p253 = scmp.eq.s32.totalorder %s24, 0
      %p254 = por %p252, %p253
      %p255 = scmp.ne.s32.totalorder %s247, %s249
      %p256 = scmp.eq.s32.totalorder %s29, 1
      %p257 = por %p255, %p256
      %p258 = scmp.ne.s32.totalorder %s249, %s250
      %p259 = scmp.eq.s32.totalorder %s29, 0
      %p260 = por %p258, %p259
      %p261 = scmp.ne.s32.totalorder %s249, %s250
      %p262 = scmp.eq.s32.totalorder %s30, 1
      %p263 = por %p261, %p262
      %p265 = scmp.ne.s32.totalorder %s250, %s264
      %p266 = scmp.eq.s32.totalorder %s30, 0
      %p267 = por %p265, %p266
      %s269 = sadd.s32 %s268, 1
      %p272 = scmp.eq.s32.totalorder %s24, 1
      %p273 = scmp.ne.s32.totalorder %s268, %s270
      %p274 = scmp.eq.s32.totalorder %s24, 0
      %p275 = por %p273, %p274
      %p276 = scmp.ne.s32.totalorder %s268, %s270
      %p277 = scmp.eq.s32.totalorder %s29, 1
      %p278 = por %p276, %p277
      %p279 = scmp.ne.s32.totalorder %s270, %s271
      %p280 = scmp.eq.s32.totalorder %s29, 0
      %p281 = por %p279, %p280
      %p282 = scmp.ne.s32.totalorder %s270, %s271
      %p283 = scmp.eq.s32.totalorder %s30, 1
      %p284 = por %p282, %p283
      %p286 = scmp.ne.s32.totalorder %s271, %s285
      %p287 = scmp.eq.s32.totalorder %s30, 0
      %p288 = por %p286, %p287
      %s290 = sadd.s32 %s289, 1
      %p293 = scmp.eq.s32.totalorder %s24, 1
      %p294 = scmp.ne.s32.totalorder %s289, %s291
      %p295 = scmp.eq.s32.totalorder %s24, 0
      %p296 = por %p294, %p295
      %p297 = scmp.ne.s32.totalorder %s289, %s291
      %p298 = scmp.eq.s32.totalorder %s29, 1
      %p299 = por %p297, %p298
      %p300 = scmp.ne.s32.totalorder %s291, %s292
      %p301 = scmp.eq.s32.totalorder %s29, 0
      %p302 = por %p300, %p301
      %p303 = scmp.ne.s32.totalorder %s291, %s292
      %p304 = scmp.eq.s32.totalorder %s30, 1
      %p305 = por %p303, %p304
      %p307 = scmp.ne.s32.totalorder %s292, %s306
      %p308 = scmp.eq.s32.totalorder %s30, 0
      %p309 = por %p307, %p308
      %s310 = ssub.s32 %s24, %s31
      %p311 = scmp.eq.s32.totalorder %s310, 0
      %s313 = sadd.s32 %s312, 1
      %s314 = scalar_select %p311, %s312, %s313
      %p317 = pneg %p311
      %p318 = scmp.eq.s32.totalorder %s24, 1
      %p319 = por %p317, %p318
      %p320 = scmp.ne.s32.totalorder %s312, %s315
      %p321 = scmp.eq.s32.totalorder %s24, 0
      %p322 = por %p320, %p321
      %p323 = scmp.ne.s32.totalorder %s312, %s315
      %p324 = scmp.eq.s32.totalorder %s29, 1
      %p325 = por %p323, %p324
      %p326 = scmp.ne.s32.totalorder %s315, %s316
      %p327 = scmp.eq.s32.totalorder %s29, 0
      %p328 = por %p326, %p327
      %p329 = scmp.ne.s32.totalorder %s315, %s316
      %p330 = scmp.eq.s32.totalorder %s30, 1
      %p331 = por %p329, %p330
      %p333 = scmp.ne.s32.totalorder %s316, %s332
      %p334 = scmp.eq.s32.totalorder %s30, 0
      %p335 = por %p333, %p334
      %p336 = scmp.le.s32.totalorder 1, %s24
      %p337 = scmp.lt.s32.totalorder %s24, 3
      %p338 = pnand %p336, %p337
      %p339 = pneg %p338
      // Predicated region
      $region9: #{tpu_custom_call.1} parent=5 // pred_check
        _
      $region10: #{tpu_custom_call.1} parent=5 // pred_check_branch
        %341 = sbr.rel (%p338) target = $region12
      $region11: #{tpu_custom_call.1} parent=5 // pred_region
        %s342 = ssub.s32 %s24, 1
        // Predicated region
        $region13: #{tpu_custom_call.1} parent=11 // pred_check
          %p343 = pneg %p71
        $region14: #{tpu_custom_call.1} parent=11 // pred_check_branch
          %345 = sbr.rel (%p343) target = $region16
        $region15: #{tpu_custom_call.1} parent=11 // pred_region
          _
        $region16: #{tpu_custom_call.1} parent=11 // pred_fallthru
          _
        // Predicated region
        $region17: #{tpu_custom_call.1} parent=11 // pred_check
          %p346 = pneg %p92
        $region18: #{tpu_custom_call.1} parent=11 // pred_check_branch
          %348 = sbr.rel (%p346) target = $region20
        $region19: #{tpu_custom_call.1} parent=11 // pred_region
          _
        $region20: #{tpu_custom_call.1} parent=11 // pred_fallthru
          _
        // Predicated region
        $region21: #{tpu_custom_call.1} parent=11 // pred_check
          %p349 = pneg %p113
        $region22: #{tpu_custom_call.1} parent=11 // pred_check_branch
          %351 = sbr.rel (%p349) target = $region24
        $region23: #{tpu_custom_call.1} parent=11 // pred_region
          %s353 = ssub.s32 512, 512
          %354 = vsyncadd [#allocation3], %s353
          %s355 = sshll.u32 [#allocation2], 4
          %s356 = int_to_ptr.vmem [resolvable:$true] %s355
          %361 = dma.hbm_to_vmem [thread:$0]  %s3, 512, %s356, [#allocation3], 64, 64, 4
        $region24: #{tpu_custom_call.1} parent=11 // pred_fallthru
          _
        // Predicated region
        $region25: #{tpu_custom_call.1} parent=11 // pred_check
          %p362 = pneg %p134
        $region26: #{tpu_custom_call.1} parent=11 // pred_check_branch
          %364 = sbr.rel (%p362) target = $region28
        $region27: #{tpu_custom_call.1} parent=11 // pred_region
          _
        $region28: #{tpu_custom_call.1} parent=11 // pred_fallthru
          _
        // Predicated region
        $region29: #{tpu_custom_call.1} parent=11 // pred_check
          %p365 = pneg %p155
        $region30: #{tpu_custom_call.1} parent=11 // pred_check_branch
          %367 = sbr.rel (%p365) target = $region32
        $region31: #{tpu_custom_call.1} parent=11 // pred_region
          _
        $region32: #{tpu_custom_call.1} parent=11 // pred_fallthru
          _
        // Predicated region
        $region33: #{tpu_custom_call.1} parent=11 // pred_check
          %p368 = pneg %p176
        $region34: #{tpu_custom_call.1} parent=11 // pred_check_branch
          %370 = sbr.rel (%p368) target = $region36
        $region35: #{tpu_custom_call.1} parent=11 // pred_region
          %s372 = ssub.s32 16, 16
          %373 = vsyncadd [#allocation6], %s372
          %s375 = sshll.u32 [#allocation5], 4
          %s376 = int_to_ptr.vmem [resolvable:$true] %s375
          %378 = dma.hbm_to_vmem [thread:$0]  %s6, 16, %s376, [#allocation6]
        $region36: #{tpu_custom_call.1} parent=11 // pred_fallthru
          _
        // Predicated region
        $region37: #{tpu_custom_call.1} parent=11 // pred_check
          %p379 = pneg %p197
        $region38: #{tpu_custom_call.1} parent=11 // pred_check_branch
          %381 = sbr.rel (%p379) target = $region40
        $region39: #{tpu_custom_call.1} parent=11 // pred_region
          _
        $region40: #{tpu_custom_call.1} parent=11 // pred_fallthru
          _
        // Predicated region
        $region41: #{tpu_custom_call.1} parent=11 // pred_check
          %p382 = pneg %p218
        $region42: #{tpu_custom_call.1} parent=11 // pred_check_branch
          %384 = sbr.rel (%p382) target = $region44
        $region43: #{tpu_custom_call.1} parent=11 // pred_region
          %s386 = ssub.s32 16, 16
          %387 = vsyncadd [#allocation6], %s386
          %s389 = sshll.u32 [#allocation7], 4
          %s390 = int_to_ptr.vmem [resolvable:$true] %s389
          %392 = dma.hbm_to_vmem [thread:$0]  %s8, 16, %s390, [#allocation6]
        $region44: #{tpu_custom_call.1} parent=11 // pred_fallthru
          _
        // Predicated region
        $region45: #{tpu_custom_call.1} parent=11 // pred_check
          %p393 = pneg %p239
        $region46: #{tpu_custom_call.1} parent=11 // pred_check_branch
          %395 = sbr.rel (%p393) target = $region48
        $region47: #{tpu_custom_call.1} parent=11 // pred_region
          _
        $region48: #{tpu_custom_call.1} parent=11 // pred_fallthru
          _
        // Predicated region
        $region49: #{tpu_custom_call.1} parent=11 // pred_check
          %p396 = pneg %p260
        $region50: #{tpu_custom_call.1} parent=11 // pred_check_branch
          %398 = sbr.rel (%p396) target = $region52
        $region51: #{tpu_custom_call.1} parent=11 // pred_region
          _
        $region52: #{tpu_custom_call.1} parent=11 // pred_fallthru
          _
        // Predicated region
        $region53: #{tpu_custom_call.1} parent=11 // pred_check
          %p399 = pneg %p281
        $region54: #{tpu_custom_call.1} parent=11 // pred_check_branch
          %401 = sbr.rel (%p399) target = $region56
        $region55: #{tpu_custom_call.1} parent=11 // pred_region
          _
        $region56: #{tpu_custom_call.1} parent=11 // pred_fallthru
          _
        // Predicated region
        $region57: #{tpu_custom_call.1} parent=11 // pred_check
          %p402 = pneg %p302
        $region58: #{tpu_custom_call.1} parent=11 // pred_check_branch
          %404 = sbr.rel (%p402) target = $region60
        $region59: #{tpu_custom_call.1} parent=11 // pred_region
          _
        $region60: #{tpu_custom_call.1} parent=11 // pred_fallthru
          _
      $region12: #{tpu_custom_call.1} parent=5 // pred_fallthru
        _
      %p405 = scmp.lt.s32.totalorder %s24, 2
      // Predicated region
      $region61: #{tpu_custom_call.1} parent=5 // pred_check
        %p406 = pneg %p405
      $region62: #{tpu_custom_call.1} parent=5 // pred_check_branch
        %408 = sbr.rel (%p406) target = $region64
      $region63: #{tpu_custom_call.1} parent=5 // pred_region
        // Predicated region
        $region65: #{tpu_custom_call.1} parent=63 // pred_check
          %p409 = pneg %p44
        $region66: #{tpu_custom_call.1} parent=63 // pred_check_branch
          %411 = sbr.rel (%p409) target = $region68
        $region67: #{tpu_custom_call.1} parent=63 // pred_region
          %s412 = smul.u32 16, %s24
          %p413 = scmp.lt.s32.totalorder %s412, 31
          %s414 = scalar_select %p413, %s412, 31
          %s415 = smul.addr %s414, 4
          %s416 = scalar_lea.vmem %s0, %s415
          %s417 = smul.u32 16, %s24
        $region68: #{tpu_custom_call.1} parent=63 // pred_fallthru
          _
      $region64: #{tpu_custom_call.1} parent=5 // pred_fallthru
        _
      %p418 = scmp.le.s32.totalorder 1, %s24
      %p419 = scmp.lt.s32.totalorder %s24, 3
      %p420 = pnand %p418, %p419
      %p421 = pneg %p420
      // Predicated region
      $region69: #{tpu_custom_call.1} parent=5 // pred_check
        _
      $region70: #{tpu_custom_call.1} parent=5 // pred_check_branch
        %423 = sbr.rel (%p420) target = $region72
      $region71: #{tpu_custom_call.1} parent=5 // pred_region
        %s424 = ssub.s32 %s24, 1
        // Predicated region
        $region73: #{tpu_custom_call.1} parent=71 // pred_check
          %p425 = pneg %p113
        $region74: #{tpu_custom_call.1} parent=71 // pred_check_branch
          %427 = sbr.rel (%p425) target = $region76
        $region75: #{tpu_custom_call.1} parent=71 // pred_region
          %428 = dma.done [#allocation3], 512
        $region76: #{tpu_custom_call.1} parent=71 // pred_fallthru
          _
        // Predicated region
        $region77: #{tpu_custom_call.1} parent=71 // pred_check
          %p429 = pneg %p176
        $region78: #{tpu_custom_call.1} parent=71 // pred_check_branch
          %431 = sbr.rel (%p429) target = $region80
        $region79: #{tpu_custom_call.1} parent=71 // pred_region
          %432 = dma.done [#allocation6], 16
        $region80: #{tpu_custom_call.1} parent=71 // pred_fallthru
          _
        // Predicated region
        $region81: #{tpu_custom_call.1} parent=71 // pred_check
          %p433 = pneg %p218
        $region82: #{tpu_custom_call.1} parent=71 // pred_check_branch
          %435 = sbr.rel (%p433) target = $region84
        $region83: #{tpu_custom_call.1} parent=71 // pred_region
          %436 = dma.done [#allocation6], 16
        $region84: #{tpu_custom_call.1} parent=71 // pred_fallthru
          _
        %s437 = smul.u32 16, %s29
        %p438 = scmp.lt.s32.totalorder %s437, 31
        %s439 = scalar_select %p438, %s437, 31
        %s440 = smul.addr %s439, 4
        %s441 = scalar_lea.vmem %s0, %s440
        %p442 = pneg %p50
        %p443 = pneg %p47
        %p444 = pneg %p71
        %p445 = pneg %p68
        %p446 = pneg %p92
        %p447 = pneg %p89
        %p448 = pneg %p113
        %p449 = pneg %p110
        %p450 = pneg %p134
        %p451 = pneg %p131
        %p452 = pneg %p155
        %p453 = pneg %p152
        %p454 = pneg %p176
        %p455 = pneg %p173
        %p456 = pneg %p197
        %p457 = pneg %p194
        %p458 = pneg %p218
        %p459 = pneg %p215
        %p460 = pneg %p239
        %p461 = pneg %p236
        %p462 = pneg %p260
        %p463 = pneg %p257
        %p464 = pneg %p281
        %p465 = pneg %p278
        %p466 = pneg %p302
        %p467 = pneg %p299
        %p468 = pneg %p328
        %p469 = pneg %p325
        %s470 = sand.u32 %s315, 1
        %s471 = scalar_lea.sflag [#allocation4], %s470
        %s472 = sand.u32 %s315, 1
        %s473 = smul.addr %s472, 128
        %s474 = scalar_lea.vmem [#allocation8], %s473
        %s475 = smul.u32 16, %s29
        %p476 = scmp.lt.s32.totalorder %s475, 31
        %s477 = scalar_select %p476, %s475, 31
        %s478 = smul.addr %s477, 4
        %s479 = scalar_lea.vmem %s0, %s478
        %s480 = smul.u32 16, %s29
        %s481 = smul.u32 16, %s29
        %v483 = vld [vmem:[%s479] sm:$0xf]
        %v484 = vld [vmem:[%s479 + $0x4] sm:$0xf]
        %v485 = vld [vmem:[%s479 + $0x8] sm:$0xf]
        %v486 = vld [vmem:[%s479 + $0xc] sm:$0xf]
        %v487 = vld [vmem:[%s479 + $0x10] sm:$0xf]
        %v488 = vld [vmem:[%s479 + $0x14] sm:$0xf]
        %v489 = vld [vmem:[%s479 + $0x18] sm:$0xf]
        %v490 = vld [vmem:[%s479 + $0x1c] sm:$0xf]
        %v491 = vld [vmem:[%s479 + $0x20] sm:$0xf]
        %v492 = vld [vmem:[%s479 + $0x24] sm:$0xf]
        %v493 = vld [vmem:[%s479 + $0x28] sm:$0xf]
        %v494 = vld [vmem:[%s479 + $0x2c] sm:$0xf]
        %v495 = vld [vmem:[%s479 + $0x30] sm:$0xf]
        %v496 = vld [vmem:[%s479 + $0x34] sm:$0xf]
        %v497 = vld [vmem:[%s479 + $0x38] sm:$0xf]
        %v498 = vld [vmem:[%s479 + $0x3c] sm:$0xf]
        %v499 = vld [vmem:[%s1] sm:$0xf]
        %v500 = vld [vmem:[%s1 + $0x4] sm:$0xf]
        %v501 = vld [vmem:[%s1 + $0x8] sm:$0xf]
        %v502 = vld [vmem:[%s1 + $0xc] sm:$0xf]
        %v503 = vld [vmem:[%s1 + $0x10] sm:$0xf]
        %v504 = vld [vmem:[%s1 + $0x14] sm:$0xf]
        %v505 = vld [vmem:[%s1 + $0x18] sm:$0xf]
        %v506 = vld [vmem:[%s1 + $0x1c] sm:$0xf]
        %v507 = vld [vmem:[%s1 + $0x20] sm:$0xf]
        %v508 = vld [vmem:[%s1 + $0x24] sm:$0xf]
        %v509 = vld [vmem:[%s1 + $0x28] sm:$0xf]
        %v510 = vld [vmem:[%s1 + $0x2c] sm:$0xf]
        %v511 = vld [vmem:[%s1 + $0x30] sm:$0xf]
        %v512 = vld [vmem:[%s1 + $0x34] sm:$0xf]
        %v513 = vld [vmem:[%s1 + $0x38] sm:$0xf]
        %v514 = vld [vmem:[%s1 + $0x3c] sm:$0xf]
        %v515 = vld [vmem:[%s2] sm:$0x1]
        %v517 = vlaneseq
        %v518 = vshrl.u32 %v517, 7
        %v519 = vsub.s32 0, %v518
        %v520 = vrot.slane %v515, %v519
        %v538 = vunpack.c.l.b16 %v483
        %v539 = vunpack.c.l.b16 %v484
        %v540 = vunpack.c.l.b16 %v485
        %v541 = vunpack.c.l.b16 %v486
        %v542 = vunpack.c.l.b16 %v487
        %v543 = vunpack.c.l.b16 %v488
        %v544 = vunpack.c.l.b16 %v489
        %v545 = vunpack.c.l.b16 %v490
        %v546 = vunpack.c.l.b16 %v491
        %v547 = vunpack.c.l.b16 %v492
        %v548 = vunpack.c.l.b16 %v493
        %v549 = vunpack.c.l.b16 %v494
        %v550 = vunpack.c.l.b16 %v495
        %v551 = vunpack.c.l.b16 %v496
        %v552 = vunpack.c.l.b16 %v497
        %v553 = vunpack.c.l.b16 %v498
        %v554 = vpack.c.b16 %v539, %v538
        %v555 = vpack.c.b16 %v541, %v540
        %v556 = vpack.c.b16 %v543, %v542
        %v557 = vpack.c.b16 %v545, %v544
        %v558 = vpack.c.b16 %v547, %v546
        %v559 = vpack.c.b16 %v549, %v548
        %v560 = vpack.c.b16 %v551, %v550
        %v561 = vpack.c.b16 %v553, %v552
        %v586 = vunpack.c.l.b16 %v499
        %v587 = vunpack.c.l.b16 %v500
        %v588 = vunpack.c.l.b16 %v501
        %v589 = vunpack.c.l.b16 %v502
        %v590 = vunpack.c.l.b16 %v503
        %v591 = vunpack.c.l.b16 %v504
        %v592 = vunpack.c.l.b16 %v505
        %v593 = vunpack.c.l.b16 %v506
        %v594 = vunpack.c.l.b16 %v507
        %v595 = vunpack.c.l.b16 %v508
        %v596 = vunpack.c.l.b16 %v509
        %v597 = vunpack.c.l.b16 %v510
        %v598 = vunpack.c.l.b16 %v511
        %v599 = vunpack.c.l.b16 %v512
        %v600 = vunpack.c.l.b16 %v513
        %v601 = vunpack.c.l.b16 %v514
        %v602 = vpack.c.b16 %v587, %v586
        %v603 = vpack.c.b16 %v589, %v588
        %v604 = vpack.c.b16 %v591, %v590
        %v605 = vpack.c.b16 %v593, %v592
        %v606 = vpack.c.b16 %v595, %v594
        %v607 = vpack.c.b16 %v597, %v596
        %v608 = vpack.c.b16 %v599, %v598
        %v609 = vpack.c.b16 %v601, %v600
        %618 = vmatprep.subr.bf16.mxu0 0
        %619 = vmatpush1.bf16.msra.mxu0 %v602
        %620 = vmatprep.subr.bf16.mxu0 0
        %621 = vmatpush1.bf16.msra.mxu0 %v603
        %622 = vmatprep.subr.bf16.mxu0 0
        %623 = vmatpush1.bf16.msra.mxu0 %v604
        %624 = vmatprep.subr.bf16.mxu0 0
        %625 = vmatpush1.bf16.msra.mxu0 %v605
        %626 = vmatprep.subr.bf16.mxu0 0
        %627 = vmatpush1.bf16.msra.mxu0 %v606
        %628 = vmatprep.subr.bf16.mxu0 0
        %629 = vmatpush1.bf16.msra.mxu0 %v607
        %630 = vmatprep.subr.bf16.mxu0 0
        %631 = vmatpush1.bf16.msra.mxu0 %v608
        %632 = vmatprep.subr.bf16.mxu0 0
        %633 = vmatpush1.bf16.msra.mxu0 %v609
        %634 = vmatprep.subr.bf16.mxu0 0
        %635 = vmatpush1.bf16.msra.mxu0 0
        %636 = vmatprep.subr.bf16.mxu0 0
        %637 = vmatpush1.bf16.msra.mxu0 0
        %638 = vmatprep.subr.bf16.mxu0 0
        %639 = vmatpush1.bf16.msra.mxu0 0
        %640 = vmatprep.subr.bf16.mxu0 0
        %641 = vmatpush1.bf16.msra.mxu0 0
        %642 = vmatprep.subr.bf16.mxu0 0
        %643 = vmatpush1.bf16.msra.mxu0 0
        %644 = vmatprep.subr.bf16.mxu0 0
        %645 = vmatpush1.bf16.msra.mxu0 0
        %646 = vmatprep.subr.bf16.mxu0 0
        %647 = vmatpush1.bf16.msra.mxu0 0
        %648 = vmatprep.subr.bf16.mxu0 0
        %649 = vmatpush1.bf16.msra.mxu0 0
        %650 = vmatprep.mubr.bf16.mxu0 0
        %651 = vmatmul.mubr.bf16.gmra.mrb[0].mxu0 %v554
        %v652 = vpop.f32.mrb[0].mxu0
        %v653 = vadd.f32 %v520, %v652
        %v654 = vpop.f32.mrb[0].mxu0
        %v655 = vpop.f32.mrb[0].mxu0
        %v656 = vadd.f32 %v520, %v655
        %v657 = vpop.f32.mrb[0].mxu0
        %658 = vmatprep.mubr.bf16.mxu0 0
        %659 = vmatmul.mubr.bf16.gmra.mrb[0].mxu0 %v555
        %v660 = vpop.f32.mrb[0].mxu0
        %v661 = vadd.f32 %v520, %v660
        %v662 = vpop.f32.mrb[0].mxu0
        %v663 = vpop.f32.mrb[0].mxu0
        %v664 = vadd.f32 %v520, %v663
        %v665 = vpop.f32.mrb[0].mxu0
        %666 = vmatprep.mubr.bf16.mxu0 0
        %667 = vmatmul.mubr.bf16.gmra.mrb[0].mxu0 %v556
        %v668 = vpop.f32.mrb[0].mxu0
        %v669 = vadd.f32 %v520, %v668
        %v670 = vpop.f32.mrb[0].mxu0
        %v671 = vpop.f32.mrb[0].mxu0
        %v672 = vadd.f32 %v520, %v671
        %v673 = vpop.f32.mrb[0].mxu0
        %674 = vmatprep.mubr.bf16.mxu0 0
        %675 = vmatmul.mubr.bf16.gmra.mrb[0].mxu0 %v557
        %v676 = vpop.f32.mrb[0].mxu0
        %v677 = vadd.f32 %v520, %v676
        %v678 = vpop.f32.mrb[0].mxu0
        %v679 = vpop.f32.mrb[0].mxu0
        %v680 = vadd.f32 %v520, %v679
        %v681 = vpop.f32.mrb[0].mxu0
        %682 = vmatprep.mubr.bf16.mxu0 0
        %683 = vmatmul.mubr.bf16.gmra.mrb[0].mxu0 %v558
        %v684 = vpop.f32.mrb[0].mxu0
        %v685 = vadd.f32 %v520, %v684
        %v686 = vpop.f32.mrb[0].mxu0
        %v687 = vpop.f32.mrb[0].mxu0
        %v688 = vadd.f32 %v520, %v687
        %v689 = vpop.f32.mrb[0].mxu0
        %690 = vmatprep.mubr.bf16.mxu0 0
        %691 = vmatmul.mubr.bf16.gmra.mrb[0].mxu0 %v559
        %v692 = vpop.f32.mrb[0].mxu0
        %v693 = vadd.f32 %v520, %v692
        %v694 = vpop.f32.mrb[0].mxu0
        %v695 = vpop.f32.mrb[0].mxu0
        %v696 = vadd.f32 %v520, %v695
        %v697 = vpop.f32.mrb[0].mxu0
        %698 = vmatprep.mubr.bf16.mxu0 0
        %699 = vmatmul.mubr.bf16.gmra.mrb[0].mxu0 %v560
        %v700 = vpop.f32.mrb[0].mxu0
        %v701 = vadd.f32 %v520, %v700
        %v702 = vpop.f32.mrb[0].mxu0
        %v703 = vpop.f32.mrb[0].mxu0
        %v704 = vadd.f32 %v520, %v703
        %v705 = vpop.f32.mrb[0].mxu0
        %706 = vmatprep.mubr.bf16.mxu0 0
        %707 = vmatmul.mubr.bf16.gmra.mrb[0].mxu0 %v561
        %v708 = vpop.f32.mrb[0].mxu0
        %v709 = vadd.f32 %v520, %v708
        %v710 = vpop.f32.mrb[0].mxu0
        %v711 = vpop.f32.mrb[0].mxu0
        %v712 = vadd.f32 %v520, %v711
        %v713 = vpop.f32.mrb[0].mxu0
        %714 = vdwg.mxu0
        %v715 = vmax.f32 %v653, 0.0
        %v716 = vmax.f32 %v656, 0.0
        %v717 = vmax.f32 %v661, 0.0
        %v718 = vmax.f32 %v664, 0.0
        %v719 = vmax.f32 %v669, 0.0
        %v720 = vmax.f32 %v672, 0.0
        %v721 = vmax.f32 %v677, 0.0
        %v722 = vmax.f32 %v680, 0.0
        %v723 = vmax.f32 %v685, 0.0
        %v724 = vmax.f32 %v688, 0.0
        %v725 = vmax.f32 %v693, 0.0
        %v726 = vmax.f32 %v696, 0.0
        %v727 = vmax.f32 %v701, 0.0
        %v728 = vmax.f32 %v704, 0.0
        %v729 = vmax.f32 %v709, 0.0
        %v730 = vmax.f32 %v712, 0.0
        %v731 = vpack.c.bf16 %v716, %v715
        %v732 = vpack.c.bf16 %v718, %v717
        %v733 = vpack.c.bf16 %v720, %v719
        %v734 = vpack.c.bf16 %v722, %v721
        %v735 = vpack.c.bf16 %v724, %v723
        %v736 = vpack.c.bf16 %v726, %v725
        %v737 = vpack.c.bf16 %v728, %v727
        %v738 = vpack.c.bf16 %v730, %v729
        %v739 = vld [vmem:[#allocation2] sm:$0xf]
        %v740 = vld [vmem:[#allocation2 + $0x4] sm:$0xf]
        %v741 = vld [vmem:[#allocation2 + $0x8] sm:$0xf]
        %v742 = vld [vmem:[#allocation2 + $0xc] sm:$0xf]
        %v743 = vld [vmem:[#allocation2 + $0x10] sm:$0xf]
        %v744 = vld [vmem:[#allocation2 + $0x14] sm:$0xf]
        %v745 = vld [vmem:[#allocation2 + $0x18] sm:$0xf]
        %v746 = vld [vmem:[#allocation2 + $0x1c] sm:$0xf]
        %v747 = vld [vmem:[%s4] sm:$0x1]
        %v749 = vlaneseq
        %v750 = vshrl.u32 %v749, 7
        %v751 = vsub.s32 0, %v750
        %v752 = vrot.slane %v747, %v751
        %v762 = vunpack.c.l.b16 %v739
        %v763 = vunpack.c.l.b16 %v740
        %v764 = vunpack.c.l.b16 %v741
        %v765 = vunpack.c.l.b16 %v742
        %v766 = vunpack.c.l.b16 %v743
        %v767 = vunpack.c.l.b16 %v744
        %v768 = vunpack.c.l.b16 %v745
        %v769 = vunpack.c.l.b16 %v746
        %v770 = vpack.c.b16 %v763, %v762
        %v771 = vpack.c.b16 %v765, %v764
        %v772 = vpack.c.b16 %v767, %v766
        %v773 = vpack.c.b16 %v769, %v768
        %vm778 = vcmask 523264
        %v780 = vsel %vm778, %v731, 0
        %v783 = vsel %vm778, %v732, 0
        %v786 = vsel %vm778, %v733, 0
        %v789 = vsel %vm778, %v734, 0
        %v792 = vsel %vm778, %v735, 0
        %v795 = vsel %vm778, %v736, 0
        %v798 = vsel %vm778, %v737, 0
        %v801 = vsel %vm778, %v738, 0
        %803 = vmatprep.subr.bf16.mxu0 0
        %804 = vmatpush1.bf16.msra.mxu0 %v770
        %805 = vmatprep.subr.bf16.mxu0 0
        %806 = vmatpush1.bf16.msra.mxu0 %v771
        %807 = vmatprep.subr.bf16.mxu0 0
        %808 = vmatpush1.bf16.msra.mxu0 %v772
        %809 = vmatprep.subr.bf16.mxu0 0
        %810 = vmatpush1.bf16.msra.mxu0 %v773
        %811 = vmatprep.subr.bf16.mxu0 0
        %812 = vmatpush1.bf16.msra.mxu0 0
        %813 = vmatprep.subr.bf16.mxu0 0
        %814 = vmatpush1.bf16.msra.mxu0 0
        %815 = vmatprep.subr.bf16.mxu0 0
        %816 = vmatpush1.bf16.msra.mxu0 0
        %817 = vmatprep.subr.bf16.mxu0 0
        %818 = vmatpush1.bf16.msra.mxu0 0
        %819 = vmatprep.subr.bf16.mxu0 0
        %820 = vmatpush1.bf16.msra.mxu0 0
        %821 = vmatprep.subr.bf16.mxu0 0
        %822 = vmatpush1.bf16.msra.mxu0 0
        %823 = vmatprep.subr.bf16.mxu0 0
        %824 = vmatpush1.bf16.msra.mxu0 0
        %825 = vmatprep.subr.bf16.mxu0 0
        %826 = vmatpush1.bf16.msra.mxu0 0
        %827 = vmatprep.subr.bf16.mxu0 0
        %828 = vmatpush1.bf16.msra.mxu0 0
        %829 = vmatprep.subr.bf16.mxu0 0
        %830 = vmatpush1.bf16.msra.mxu0 0
        %831 = vmatprep.subr.bf16.mxu0 0
        %832 = vmatpush1.bf16.msra.mxu0 0
        %833 = vmatprep.subr.bf16.mxu0 0
        %834 = vmatpush1.bf16.msra.mxu0 0
        %835 = vmatprep.mubr.bf16.mxu0 0
        %836 = vmatmul.mubr.bf16.gmra.mrb[0].mxu0 %v780
        %v837 = vpop.f32.mrb[0].mxu0
        %v838 = vadd.f32 %v752, %v837
        %v839 = vpop.f32.mrb[0].mxu0
        %v840 = vpop.f32.mrb[0].mxu0
        %v841 = vadd.f32 %v752, %v840
        %v842 = vpop.f32.mrb[0].mxu0
        %843 = vmatprep.mubr.bf16.mxu0 0
        %844 = vmatmul.mubr.bf16.gmra.mrb[0].mxu0 %v783
        %v845 = vpop.f32.mrb[0].mxu0
        %v846 = vadd.f32 %v752, %v845
        %v847 = vpop.f32.mrb[0].mxu0
        %v848 = vpop.f32.mrb[0].mxu0
        %v849 = vadd.f32 %v752, %v848
        %v850 = vpop.f32.mrb[0].mxu0
        %851 = vmatprep.mubr.bf16.mxu0 0
        %852 = vmatmul.mubr.bf16.gmra.mrb[0].mxu0 %v786
        %v853 = vpop.f32.mrb[0].mxu0
        %v854 = vadd.f32 %v752, %v853
        %v855 = vpop.f32.mrb[0].mxu0
        %v856 = vpop.f32.mrb[0].mxu0
        %v857 = vadd.f32 %v752, %v856
        %v858 = vpop.f32.mrb[0].mxu0
        %859 = vmatprep.mubr.bf16.mxu0 0
        %860 = vmatmul.mubr.bf16.gmra.mrb[0].mxu0 %v789
        %v861 = vpop.f32.mrb[0].mxu0
        %v862 = vadd.f32 %v752, %v861
        %v863 = vpop.f32.mrb[0].mxu0
        %v864 = vpop.f32.mrb[0].mxu0
        %v865 = vadd.f32 %v752, %v864
        %v866 = vpop.f32.mrb[0].mxu0
        %867 = vmatprep.mubr.bf16.mxu0 0
        %868 = vmatmul.mubr.bf16.gmra.mrb[0].mxu0 %v792
        %v869 = vpop.f32.mrb[0].mxu0
        %v870 = vadd.f32 %v752, %v869
        %v871 = vpop.f32.mrb[0].mxu0
        %v872 = vpop.f32.mrb[0].mxu0
        %v873 = vadd.f32 %v752, %v872
        %v874 = vpop.f32.mrb[0].mxu0
        %875 = vmatprep.mubr.bf16.mxu0 0
        %876 = vmatmul.mubr.bf16.gmra.mrb[0].mxu0 %v795
        %v877 = vpop.f32.mrb[0].mxu0
        %v878 = vadd.f32 %v752, %v877
        %v879 = vpop.f32.mrb[0].mxu0
        %v880 = vpop.f32.mrb[0].mxu0
        %v881 = vadd.f32 %v752, %v880
        %v882 = vpop.f32.mrb[0].mxu0
        %883 = vmatprep.mubr.bf16.mxu0 0
        %884 = vmatmul.mubr.bf16.gmra.mrb[0].mxu0 %v798
        %v885 = vpop.f32.mrb[0].mxu0
        %v886 = vadd.f32 %v752, %v885
        %v887 = vpop.f32.mrb[0].mxu0
        %v888 = vpop.f32.mrb[0].mxu0
        %v889 = vadd.f32 %v752, %v888
        %v890 = vpop.f32.mrb[0].mxu0
        %891 = vmatprep.mubr.bf16.mxu0 0
        %892 = vmatmul.mubr.bf16.gmra.mrb[0].mxu0 %v801
        %v893 = vpop.f32.mrb[0].mxu0
        %v894 = vadd.f32 %v752, %v893
        %v895 = vpop.f32.mrb[0].mxu0
        %v896 = vpop.f32.mrb[0].mxu0
        %v897 = vadd.f32 %v752, %v896
        %v898 = vpop.f32.mrb[0].mxu0
        %899 = vdwg.mxu0
        %v900 = vmax.f32 %v838, 0.0
        %v901 = vmax.f32 %v841, 0.0
        %v902 = vmax.f32 %v846, 0.0
        %v903 = vmax.f32 %v849, 0.0
        %v904 = vmax.f32 %v854, 0.0
        %v905 = vmax.f32 %v857, 0.0
        %v906 = vmax.f32 %v862, 0.0
        %v907 = vmax.f32 %v865, 0.0
        %v908 = vmax.f32 %v870, 0.0
        %v909 = vmax.f32 %v873, 0.0
        %v910 = vmax.f32 %v878, 0.0
        %v911 = vmax.f32 %v881, 0.0
        %v912 = vmax.f32 %v886, 0.0
        %v913 = vmax.f32 %v889, 0.0
        %v914 = vmax.f32 %v894, 0.0
        %v915 = vmax.f32 %v897, 0.0
        %v916 = vpack.c.bf16 %v901, %v900
        %v917 = vpack.c.bf16 %v903, %v902
        %v918 = vpack.c.bf16 %v905, %v904
        %v919 = vpack.c.bf16 %v907, %v906
        %v920 = vpack.c.bf16 %v909, %v908
        %v921 = vpack.c.bf16 %v911, %v910
        %v922 = vpack.c.bf16 %v913, %v912
        %v923 = vpack.c.bf16 %v915, %v914
        %v924 = vld [vmem:[%s5] sm:$0xf]
        %v925 = vld [vmem:[%s5 + $0x4] sm:$0xf]
        %v926 = vld [vmem:[%s5 + $0x8] sm:$0xf]
        %v927 = vld [vmem:[%s5 + $0xc] sm:$0xf]
        %v928 = vld [vmem:[%s5 + $0x10] sm:$0xf]
        %v929 = vld [vmem:[%s5 + $0x14] sm:$0xf]
        %v930 = vld [vmem:[%s5 + $0x18] sm:$0xf]
        %v931 = vld [vmem:[%s5 + $0x1c] sm:$0xf]
        %v932 = vld [vmem:[#allocation5] sm:$0x1]
        %v934 = vlaneseq
        %v935 = vshrl.u32 %v934, 7
        %v936 = vsub.s32 0, %v935
        %v937 = vrot.slane %v932, %v936
        %v947 = vunpack.c.l.b16 %v924
        %v948 = vunpack.c.l.b16 %v925
        %v949 = vunpack.c.l.b16 %v926
        %v950 = vunpack.c.l.b16 %v927
        %v951 = vunpack.c.l.b16 %v928
        %v952 = vunpack.c.l.b16 %v929
        %v953 = vunpack.c.l.b16 %v930
        %v954 = vunpack.c.l.b16 %v931
        %v955 = vpack.c.b16 %v948, %v947
        %v956 = vpack.c.b16 %v950, %v949
        %v957 = vpack.c.b16 %v952, %v951
        %v958 = vpack.c.b16 %v954, %v953
        %v964 = vsel %vm778, %v916, 0
        %v967 = vsel %vm778, %v917, 0
        %v970 = vsel %vm778, %v918, 0
        %v973 = vsel %vm778, %v919, 0
        %v976 = vsel %vm778, %v920, 0
        %v979 = vsel %vm778, %v921, 0
        %v982 = vsel %vm778, %v922, 0
        %v985 = vsel %vm778, %v923, 0
        %987 = vmatprep.subr.bf16.mxu0 0
        %988 = vmatpush1.bf16.msra.mxu0 %v955
        %989 = vmatprep.subr.bf16.mxu0 0
        %990 = vmatpush1.bf16.msra.mxu0 %v956
        %991 = vmatprep.subr.bf16.mxu0 0
        %992 = vmatpush1.bf16.msra.mxu0 %v957
        %993 = vmatprep.subr.bf16.mxu0 0
        %994 = vmatpush1.bf16.msra.mxu0 %v958
        %995 = vmatprep.subr.bf16.mxu0 0
        %996 = vmatpush1.bf16.msra.mxu0 0
        %997 = vmatprep.subr.bf16.mxu0 0
        %998 = vmatpush1.bf16.msra.mxu0 0
        %999 = vmatprep.subr.bf16.mxu0 0
        %1000 = vmatpush1.bf16.msra.mxu0 0
        %1001 = vmatprep.subr.bf16.mxu0 0
        %1002 = vmatpush1.bf16.msra.mxu0 0
        %1003 = vmatprep.subr.bf16.mxu0 0
        %1004 = vmatpush1.bf16.msra.mxu0 0
        %1005 = vmatprep.subr.bf16.mxu0 0
        %1006 = vmatpush1.bf16.msra.mxu0 0
        %1007 = vmatprep.subr.bf16.mxu0 0
        %1008 = vmatpush1.bf16.msra.mxu0 0
        %1009 = vmatprep.subr.bf16.mxu0 0
        %1010 = vmatpush1.bf16.msra.mxu0 0
        %1011 = vmatprep.subr.bf16.mxu0 0
        %1012 = vmatpush1.bf16.msra.mxu0 0
        %1013 = vmatprep.subr.bf16.mxu0 0
        %1014 = vmatpush1.bf16.msra.mxu0 0
        %1015 = vmatprep.subr.bf16.mxu0 0
        %1016 = vmatpush1.bf16.msra.mxu0 0
        %1017 = vmatprep.subr.bf16.mxu0 0
        %1018 = vmatpush1.bf16.msra.mxu0 0
        %1019 = vmatprep.mubr.bf16.mxu0 0
        %1020 = vmatmul.mubr.bf16.gmra.mrb[0].mxu0 %v964
        %v1021 = vpop.f32.mrb[0].mxu0
        %v1022 = vadd.f32 %v937, %v1021
        %v1023 = vpop.f32.mrb[0].mxu0
        %v1024 = vpop.f32.mrb[0].mxu0
        %v1025 = vadd.f32 %v937, %v1024
        %v1026 = vpop.f32.mrb[0].mxu0
        %1027 = vmatprep.mubr.bf16.mxu0 0
        %1028 = vmatmul.mubr.bf16.gmra.mrb[0].mxu0 %v967
        %v1029 = vpop.f32.mrb[0].mxu0
        %v1030 = vadd.f32 %v937, %v1029
        %v1031 = vpop.f32.mrb[0].mxu0
        %v1032 = vpop.f32.mrb[0].mxu0
        %v1033 = vadd.f32 %v937, %v1032
        %v1034 = vpop.f32.mrb[0].mxu0
        %1035 = vmatprep.mubr.bf16.mxu0 0
        %1036 = vmatmul.mubr.bf16.gmra.mrb[0].mxu0 %v970
        %v1037 = vpop.f32.mrb[0].mxu0
        %v1038 = vadd.f32 %v937, %v1037
        %v1039 = vpop.f32.mrb[0].mxu0
        %v1040 = vpop.f32.mrb[0].mxu0
        %v1041 = vadd.f32 %v937, %v1040
        %v1042 = vpop.f32.mrb[0].mxu0
        %1043 = vmatprep.mubr.bf16.mxu0 0
        %1044 = vmatmul.mubr.bf16.gmra.mrb[0].mxu0 %v973
        %v1045 = vpop.f32.mrb[0].mxu0
        %v1046 = vadd.f32 %v937, %v1045
        %v1047 = vpop.f32.mrb[0].mxu0
        %v1048 = vpop.f32.mrb[0].mxu0
        %v1049 = vadd.f32 %v937, %v1048
        %v1050 = vpop.f32.mrb[0].mxu0
        %1051 = vmatprep.mubr.bf16.mxu0 0
        %1052 = vmatmul.mubr.bf16.gmra.mrb[0].mxu0 %v976
        %v1053 = vpop.f32.mrb[0].mxu0
        %v1054 = vadd.f32 %v937, %v1053
        %v1055 = vpop.f32.mrb[0].mxu0
        %v1056 = vpop.f32.mrb[0].mxu0
        %v1057 = vadd.f32 %v937, %v1056
        %v1058 = vpop.f32.mrb[0].mxu0
        %1059 = vmatprep.mubr.bf16.mxu0 0
        %1060 = vmatmul.mubr.bf16.gmra.mrb[0].mxu0 %v979
        %v1061 = vpop.f32.mrb[0].mxu0
        %v1062 = vadd.f32 %v937, %v1061
        %v1063 = vpop.f32.mrb[0].mxu0
        %v1064 = vpop.f32.mrb[0].mxu0
        %v1065 = vadd.f32 %v937, %v1064
        %v1066 = vpop.f32.mrb[0].mxu0
        %1067 = vmatprep.mubr.bf16.mxu0 0
        %1068 = vmatmul.mubr.bf16.gmra.mrb[0].mxu0 %v982
        %v1069 = vpop.f32.mrb[0].mxu0
        %v1070 = vadd.f32 %v937, %v1069
        %v1071 = vpop.f32.mrb[0].mxu0
        %v1072 = vpop.f32.mrb[0].mxu0
        %v1073 = vadd.f32 %v937, %v1072
        %v1074 = vpop.f32.mrb[0].mxu0
        %1075 = vmatprep.mubr.bf16.mxu0 0
        %1076 = vmatmul.mubr.bf16.gmra.mrb[0].mxu0 %v985
        %v1077 = vpop.f32.mrb[0].mxu0
        %v1078 = vadd.f32 %v937, %v1077
        %v1079 = vpop.f32.mrb[0].mxu0
        %v1080 = vpop.f32.mrb[0].mxu0
        %v1081 = vadd.f32 %v937, %v1080
        %v1082 = vpop.f32.mrb[0].mxu0
        %1083 = vdwg.mxu0
        %v1084 = vpack.c.bf16 %v1025, %v1022
        %v1085 = vpack.c.bf16 %v1033, %v1030
        %v1086 = vpack.c.bf16 %v1041, %v1038
        %v1087 = vpack.c.bf16 %v1049, %v1046
        %v1088 = vpack.c.bf16 %v1057, %v1054
        %v1089 = vpack.c.bf16 %v1065, %v1062
        %v1090 = vpack.c.bf16 %v1073, %v1070
        %v1091 = vpack.c.bf16 %v1081, %v1078
        %v1092 = vld [vmem:[%s7] sm:$0xf]
        %v1093 = vld [vmem:[%s7 + $0x4] sm:$0xf]
        %v1094 = vld [vmem:[%s7 + $0x8] sm:$0xf]
        %v1095 = vld [vmem:[%s7 + $0xc] sm:$0xf]
        %v1096 = vld [vmem:[#allocation7] sm:$0x1]
        %v1098 = vlaneseq
        %v1099 = vshrl.u32 %v1098, 7
        %v1100 = vsub.s32 0, %v1099
        %v1101 = vrot.slane %v1096, %v1100
        %v1107 = vunpack.c.l.b16 %v1092
        %v1108 = vunpack.c.l.b16 %v1093
        %v1109 = vunpack.c.l.b16 %v1094
        %v1110 = vunpack.c.l.b16 %v1095
        %v1111 = vpack.c.b16 %v1108, %v1107
        %v1112 = vpack.c.b16 %v1110, %v1109
        %vm1115 = vcmask 261120
        %v1117 = vsel %vm1115, %v1084, 0
        %v1120 = vsel %vm1115, %v1085, 0
        %v1123 = vsel %vm1115, %v1086, 0
        %v1126 = vsel %vm1115, %v1087, 0
        %v1129 = vsel %vm1115, %v1088, 0
        %v1132 = vsel %vm1115, %v1089, 0
        %v1135 = vsel %vm1115, %v1090, 0
        %v1138 = vsel %vm1115, %v1091, 0
        %1140 = vmatprep.subr.bf16.mxu0 0
        %1141 = vmatpush1.bf16.msra.mxu0 %v1111
        %1142 = vmatprep.subr.bf16.mxu0 0
        %1143 = vmatpush1.bf16.msra.mxu0 %v1112
        %1144 = vmatprep.subr.bf16.mxu0 0
        %1145 = vmatpush1.bf16.msra.mxu0 0
        %1146 = vmatprep.subr.bf16.mxu0 0
        %1147 = vmatpush1.bf16.msra.mxu0 0
        %1148 = vmatprep.subr.bf16.mxu0 0
        %1149 = vmatpush1.bf16.msra.mxu0 0
        %1150 = vmatprep.subr.bf16.mxu0 0
        %1151 = vmatpush1.bf16.msra.mxu0 0
        %1152 = vmatprep.subr.bf16.mxu0 0
        %1153 = vmatpush1.bf16.msra.mxu0 0
        %1154 = vmatprep.subr.bf16.mxu0 0
        %1155 = vmatpush1.bf16.msra.mxu0 0
        %1156 = vmatprep.subr.bf16.mxu0 0
        %1157 = vmatpush1.bf16.msra.mxu0 0
        %1158 = vmatprep.subr.bf16.mxu0 0
        %1159 = vmatpush1.bf16.msra.mxu0 0
        %1160 = vmatprep.subr.bf16.mxu0 0
        %1161 = vmatpush1.bf16.msra.mxu0 0
        %1162 = vmatprep.subr.bf16.mxu0 0
        %1163 = vmatpush1.bf16.msra.mxu0 0
        %1164 = vmatprep.subr.bf16.mxu0 0
        %1165 = vmatpush1.bf16.msra.mxu0 0
        %1166 = vmatprep.subr.bf16.mxu0 0
        %1167 = vmatpush1.bf16.msra.mxu0 0
        %1168 = vmatprep.subr.bf16.mxu0 0
        %1169 = vmatpush1.bf16.msra.mxu0 0
        %1170 = vmatprep.subr.bf16.mxu0 0
        %1171 = vmatpush1.bf16.msra.mxu0 0
        %1172 = vmatprep.mubr.bf16.mxu0 0
        %1173 = vmatmul.mubr.bf16.gmra.mrb[0].mxu0 %v1117
        %v1174 = vpop.f32.mrb[0].mxu0
        %v1175 = vadd.f32 %v1101, %v1174
        %v1176 = vpop.f32.mrb[0].mxu0
        %v1177 = vpop.f32.mrb[0].mxu0
        %v1178 = vadd.f32 %v1101, %v1177
        %v1179 = vpop.f32.mrb[0].mxu0
        %1180 = vmatprep.mubr.bf16.mxu0 0
        %1181 = vmatmul.mubr.bf16.gmra.mrb[0].mxu0 %v1120
        %v1182 = vpop.f32.mrb[0].mxu0
        %v1183 = vadd.f32 %v1101, %v1182
        %v1184 = vpop.f32.mrb[0].mxu0
        %v1185 = vpop.f32.mrb[0].mxu0
        %v1186 = vadd.f32 %v1101, %v1185
        %v1187 = vpop.f32.mrb[0].mxu0
        %1188 = vmatprep.mubr.bf16.mxu0 0
        %1189 = vmatmul.mubr.bf16.gmra.mrb[0].mxu0 %v1123
        %v1190 = vpop.f32.mrb[0].mxu0
        %v1191 = vadd.f32 %v1101, %v1190
        %v1192 = vpop.f32.mrb[0].mxu0
        %v1193 = vpop.f32.mrb[0].mxu0
        %v1194 = vadd.f32 %v1101, %v1193
        %v1195 = vpop.f32.mrb[0].mxu0
        %1196 = vmatprep.mubr.bf16.mxu0 0
        %1197 = vmatmul.mubr.bf16.gmra.mrb[0].mxu0 %v1126
        %v1198 = vpop.f32.mrb[0].mxu0
        %v1199 = vadd.f32 %v1101, %v1198
        %v1200 = vpop.f32.mrb[0].mxu0
        %v1201 = vpop.f32.mrb[0].mxu0
        %v1202 = vadd.f32 %v1101, %v1201
        %v1203 = vpop.f32.mrb[0].mxu0
        %1204 = vmatprep.mubr.bf16.mxu0 0
        %1205 = vmatmul.mubr.bf16.gmra.mrb[0].mxu0 %v1129
        %v1206 = vpop.f32.mrb[0].mxu0
        %v1207 = vadd.f32 %v1101, %v1206
        %v1208 = vpop.f32.mrb[0].mxu0
        %v1209 = vpop.f32.mrb[0].mxu0
        %v1210 = vadd.f32 %v1101, %v1209
        %v1211 = vpop.f32.mrb[0].mxu0
        %1212 = vmatprep.mubr.bf16.mxu0 0
        %1213 = vmatmul.mubr.bf16.gmra.mrb[0].mxu0 %v1132
        %v1214 = vpop.f32.mrb[0].mxu0
        %v1215 = vadd.f32 %v1101, %v1214
        %v1216 = vpop.f32.mrb[0].mxu0
        %v1217 = vpop.f32.mrb[0].mxu0
        %v1218 = vadd.f32 %v1101, %v1217
        %v1219 = vpop.f32.mrb[0].mxu0
        %1220 = vmatprep.mubr.bf16.mxu0 0
        %1221 = vmatmul.mubr.bf16.gmra.mrb[0].mxu0 %v1135
        %v1222 = vpop.f32.mrb[0].mxu0
        %v1223 = vadd.f32 %v1101, %v1222
        %v1224 = vpop.f32.mrb[0].mxu0
        %v1225 = vpop.f32.mrb[0].mxu0
        %v1226 = vadd.f32 %v1101, %v1225
        %v1227 = vpop.f32.mrb[0].mxu0
        %1228 = vmatprep.mubr.bf16.mxu0 0
        %1229 = vmatmul.mubr.bf16.gmra.mrb[0].mxu0 %v1138
        %v1230 = vpop.f32.mrb[0].mxu0
        %v1231 = vadd.f32 %v1101, %v1230
        %v1232 = vpop.f32.mrb[0].mxu0
        %v1233 = vpop.f32.mrb[0].mxu0
        %v1234 = vadd.f32 %v1101, %v1233
        %v1235 = vpop.f32.mrb[0].mxu0
        %1236 = vdwg.mxu0
        %v1237 = vmax.f32 %v1175, 0.0
        %v1238 = vmax.f32 %v1178, 0.0
        %v1239 = vmax.f32 %v1183, 0.0
        %v1240 = vmax.f32 %v1186, 0.0
        %v1241 = vmax.f32 %v1191, 0.0
        %v1242 = vmax.f32 %v1194, 0.0
        %v1243 = vmax.f32 %v1199, 0.0
        %v1244 = vmax.f32 %v1202, 0.0
        %v1245 = vmax.f32 %v1207, 0.0
        %v1246 = vmax.f32 %v1210, 0.0
        %v1247 = vmax.f32 %v1215, 0.0
        %v1248 = vmax.f32 %v1218, 0.0
        %v1249 = vmax.f32 %v1223, 0.0
        %v1250 = vmax.f32 %v1226, 0.0
        %v1251 = vmax.f32 %v1231, 0.0
        %v1252 = vmax.f32 %v1234, 0.0
        %v1253 = vpack.c.bf16 %v1238, %v1237
        %v1254 = vpack.c.bf16 %v1240, %v1239
        %v1255 = vpack.c.bf16 %v1242, %v1241
        %v1256 = vpack.c.bf16 %v1244, %v1243
        %v1257 = vpack.c.bf16 %v1246, %v1245
        %v1258 = vpack.c.bf16 %v1248, %v1247
        %v1259 = vpack.c.bf16 %v1250, %v1249
        %v1260 = vpack.c.bf16 %v1252, %v1251
        %v1261 = vld [vmem:[%s9] sm:$0xf]
        %v1262 = vld [vmem:[%s9 + $0x4] sm:$0xf]
        %v1263 = vld [vmem:[%s9 + $0x8] sm:$0xf]
        %v1264 = vld [vmem:[%s9 + $0xc] sm:$0xf]
        %v1265 = vld [vmem:[%s10] sm:$0x1]
        %v1267 = vlaneseq
        %v1268 = vshrl.u32 %v1267, 7
        %v1269 = vsub.s32 0, %v1268
        %v1270 = vrot.slane %v1265, %v1269
        %v1276 = vunpack.c.l.b16 %v1261
        %v1277 = vunpack.c.l.b16 %v1262
        %v1278 = vunpack.c.l.b16 %v1263
        %v1279 = vunpack.c.l.b16 %v1264
        %v1280 = vpack.c.b16 %v1277, %v1276
        %v1281 = vpack.c.b16 %v1279, %v1278
        %v1285 = vsel %vm1115, %v1253, 0
        %v1288 = vsel %vm1115, %v1254, 0
        %v1291 = vsel %vm1115, %v1255, 0
        %v1294 = vsel %vm1115, %v1256, 0
        %v1297 = vsel %vm1115, %v1257, 0
        %v1300 = vsel %vm1115, %v1258, 0
        %v1303 = vsel %vm1115, %v1259, 0
        %v1306 = vsel %vm1115, %v1260, 0
        %1308 = vmatprep.subr.bf16.mxu0 0
        %1309 = vmatpush1.bf16.msra.mxu0 %v1280
        %1310 = vmatprep.subr.bf16.mxu0 0
        %1311 = vmatpush1.bf16.msra.mxu0 %v1281
        %1312 = vmatprep.subr.bf16.mxu0 0
        %1313 = vmatpush1.bf16.msra.mxu0 0
        %1314 = vmatprep.subr.bf16.mxu0 0
        %1315 = vmatpush1.bf16.msra.mxu0 0
        %1316 = vmatprep.subr.bf16.mxu0 0
        %1317 = vmatpush1.bf16.msra.mxu0 0
        %1318 = vmatprep.subr.bf16.mxu0 0
        %1319 = vmatpush1.bf16.msra.mxu0 0
        %1320 = vmatprep.subr.bf16.mxu0 0
        %1321 = vmatpush1.bf16.msra.mxu0 0
        %1322 = vmatprep.subr.bf16.mxu0 0
        %1323 = vmatpush1.bf16.msra.mxu0 0
        %1324 = vmatprep.subr.bf16.mxu0 0
        %1325 = vmatpush1.bf16.msra.mxu0 0
        %1326 = vmatprep.subr.bf16.mxu0 0
        %1327 = vmatpush1.bf16.msra.mxu0 0
        %1328 = vmatprep.subr.bf16.mxu0 0
        %1329 = vmatpush1.bf16.msra.mxu0 0
        %1330 = vmatprep.subr.bf16.mxu0 0
        %1331 = vmatpush1.bf16.msra.mxu0 0
        %1332 = vmatprep.subr.bf16.mxu0 0
        %1333 = vmatpush1.bf16.msra.mxu0 0
        %1334 = vmatprep.subr.bf16.mxu0 0
        %1335 = vmatpush1.bf16.msra.mxu0 0
        %1336 = vmatprep.subr.bf16.mxu0 0
        %1337 = vmatpush1.bf16.msra.mxu0 0
        %1338 = vmatprep.subr.bf16.mxu0 0
        %1339 = vmatpush1.bf16.msra.mxu0 0
        %1340 = vmatprep.mubr.bf16.mxu0 0
        %1341 = vmatmul.mubr.bf16.gmra.mrb[0].mxu0 %v1285
        %v1342 = vpop.f32.mrb[0].mxu0
        %v1343 = vadd.f32 %v1270, %v1342
        %v1344 = vpop.f32.mrb[0].mxu0
        %v1345 = vpop.f32.mrb[0].mxu0
        %v1346 = vadd.f32 %v1270, %v1345
        %v1347 = vpop.f32.mrb[0].mxu0
        %1348 = vmatprep.mubr.bf16.mxu0 0
        %1349 = vmatmul.mubr.bf16.gmra.mrb[0].mxu0 %v1288
        %v1350 = vpop.f32.mrb[0].mxu0
        %v1351 = vadd.f32 %v1270, %v1350
        %v1352 = vpop.f32.mrb[0].mxu0
        %v1353 = vpop.f32.mrb[0].mxu0
        %v1354 = vadd.f32 %v1270, %v1353
        %v1355 = vpop.f32.mrb[0].mxu0
        %1356 = vmatprep.mubr.bf16.mxu0 0
        %1357 = vmatmul.mubr.bf16.gmra.mrb[0].mxu0 %v1291
        %v1358 = vpop.f32.mrb[0].mxu0
        %v1359 = vadd.f32 %v1270, %v1358
        %v1360 = vpop.f32.mrb[0].mxu0
        %v1361 = vpop.f32.mrb[0].mxu0
        %v1362 = vadd.f32 %v1270, %v1361
        %v1363 = vpop.f32.mrb[0].mxu0
        %1364 = vmatprep.mubr.bf16.mxu0 0
        %1365 = vmatmul.mubr.bf16.gmra.mrb[0].mxu0 %v1294
        %v1366 = vpop.f32.mrb[0].mxu0
        %v1367 = vadd.f32 %v1270, %v1366
        %v1368 = vpop.f32.mrb[0].mxu0
        %v1369 = vpop.f32.mrb[0].mxu0
        %v1370 = vadd.f32 %v1270, %v1369
        %v1371 = vpop.f32.mrb[0].mxu0
        %1372 = vmatprep.mubr.bf16.mxu0 0
        %1373 = vmatmul.mubr.bf16.gmra.mrb[0].mxu0 %v1297
        %v1374 = vpop.f32.mrb[0].mxu0
        %v1375 = vadd.f32 %v1270, %v1374
        %v1376 = vpop.f32.mrb[0].mxu0
        %v1377 = vpop.f32.mrb[0].mxu0
        %v1378 = vadd.f32 %v1270, %v1377
        %v1379 = vpop.f32.mrb[0].mxu0
        %1380 = vmatprep.mubr.bf16.mxu0 0
        %1381 = vmatmul.mubr.bf16.gmra.mrb[0].mxu0 %v1300
        %v1382 = vpop.f32.mrb[0].mxu0
        %v1383 = vadd.f32 %v1270, %v1382
        %v1384 = vpop.f32.mrb[0].mxu0
        %v1385 = vpop.f32.mrb[0].mxu0
        %v1386 = vadd.f32 %v1270, %v1385
        %v1387 = vpop.f32.mrb[0].mxu0
        %1388 = vmatprep.mubr.bf16.mxu0 0
        %1389 = vmatmul.mubr.bf16.gmra.mrb[0].mxu0 %v1303
        %v1390 = vpop.f32.mrb[0].mxu0
        %v1391 = vadd.f32 %v1270, %v1390
        %v1392 = vpop.f32.mrb[0].mxu0
        %v1393 = vpop.f32.mrb[0].mxu0
        %v1394 = vadd.f32 %v1270, %v1393
        %v1395 = vpop.f32.mrb[0].mxu0
        %1396 = vmatprep.mubr.bf16.mxu0 0
        %1397 = vmatmul.mubr.bf16.gmra.mrb[0].mxu0 %v1306
        %v1398 = vpop.f32.mrb[0].mxu0
        %v1399 = vadd.f32 %v1270, %v1398
        %v1400 = vpop.f32.mrb[0].mxu0
        %v1401 = vpop.f32.mrb[0].mxu0
        %v1402 = vadd.f32 %v1270, %v1401
        %v1403 = vpop.f32.mrb[0].mxu0
        %1404 = vdwg.mxu0
        %v1405 = vmax.f32 %v1343, 0.0
        %v1406 = vmax.f32 %v1346, 0.0
        %v1407 = vmax.f32 %v1351, 0.0
        %v1408 = vmax.f32 %v1354, 0.0
        %v1409 = vmax.f32 %v1359, 0.0
        %v1410 = vmax.f32 %v1362, 0.0
        %v1411 = vmax.f32 %v1367, 0.0
        %v1412 = vmax.f32 %v1370, 0.0
        %v1413 = vmax.f32 %v1375, 0.0
        %v1414 = vmax.f32 %v1378, 0.0
        %v1415 = vmax.f32 %v1383, 0.0
        %v1416 = vmax.f32 %v1386, 0.0
        %v1417 = vmax.f32 %v1391, 0.0
        %v1418 = vmax.f32 %v1394, 0.0
        %v1419 = vmax.f32 %v1399, 0.0
        %v1420 = vmax.f32 %v1402, 0.0
        %v1421 = vpack.c.bf16 %v1406, %v1405
        %v1422 = vpack.c.bf16 %v1408, %v1407
        %v1423 = vpack.c.bf16 %v1410, %v1409
        %v1424 = vpack.c.bf16 %v1412, %v1411
        %v1425 = vpack.c.bf16 %v1414, %v1413
        %v1426 = vpack.c.bf16 %v1416, %v1415
        %v1427 = vpack.c.bf16 %v1418, %v1417
        %v1428 = vpack.c.bf16 %v1420, %v1419
        %v1429 = vld [vmem:[%s11] sm:$0xf]
        %v1430 = vld [vmem:[%s11 + $0x4] sm:$0xf]
        %v1431 = vld [vmem:[%s12] sm:$0x1]
        %v1433 = vlaneseq
        %v1434 = vshrl.u32 %v1433, 7
        %v1435 = vsub.s32 0, %v1434
        %v1436 = vrot.slane %v1431, %v1435
        %v1440 = vunpack.c.l.b16 %v1429
        %v1441 = vunpack.c.l.b16 %v1430
        %v1442 = vpack.c.b16 %v1441, %v1440
        %vm1444 = vcmask 130048
        %v1446 = vsel %vm1444, %v1421, 0
        %v1449 = vsel %vm1444, %v1422, 0
        %v1452 = vsel %vm1444, %v1423, 0
        %v1455 = vsel %vm1444, %v1424, 0
        %v1458 = vsel %vm1444, %v1425, 0
        %v1461 = vsel %vm1444, %v1426, 0
        %v1464 = vsel %vm1444, %v1427, 0
        %v1467 = vsel %vm1444, %v1428, 0
        %1469 = vmatprep.subr.bf16.mxu0 0
        %1470 = vmatpush1.bf16.msra.mxu0 %v1442
        %1471 = vmatprep.subr.bf16.mxu0 0
        %1472 = vmatpush1.bf16.msra.mxu0 0
        %1473 = vmatprep.subr.bf16.mxu0 0
        %1474 = vmatpush1.bf16.msra.mxu0 0
        %1475 = vmatprep.subr.bf16.mxu0 0
        %1476 = vmatpush1.bf16.msra.mxu0 0
        %1477 = vmatprep.subr.bf16.mxu0 0
        %1478 = vmatpush1.bf16.msra.mxu0 0
        %1479 = vmatprep.subr.bf16.mxu0 0
        %1480 = vmatpush1.bf16.msra.mxu0 0
        %1481 = vmatprep.subr.bf16.mxu0 0
        %1482 = vmatpush1.bf16.msra.mxu0 0
        %1483 = vmatprep.subr.bf16.mxu0 0
        %1484 = vmatpush1.bf16.msra.mxu0 0
        %1485 = vmatprep.subr.bf16.mxu0 0
        %1486 = vmatpush1.bf16.msra.mxu0 0
        %1487 = vmatprep.subr.bf16.mxu0 0
        %1488 = vmatpush1.bf16.msra.mxu0 0
        %1489 = vmatprep.subr.bf16.mxu0 0
        %1490 = vmatpush1.bf16.msra.mxu0 0
        %1491 = vmatprep.subr.bf16.mxu0 0
        %1492 = vmatpush1.bf16.msra.mxu0 0
        %1493 = vmatprep.subr.bf16.mxu0 0
        %1494 = vmatpush1.bf16.msra.mxu0 0
        %1495 = vmatprep.subr.bf16.mxu0 0
        %1496 = vmatpush1.bf16.msra.mxu0 0
        %1497 = vmatprep.subr.bf16.mxu0 0
        %1498 = vmatpush1.bf16.msra.mxu0 0
        %1499 = vmatprep.subr.bf16.mxu0 0
        %1500 = vmatpush1.bf16.msra.mxu0 0
        %1501 = vmatprep.mubr.bf16.mxu0 0
        %1502 = vmatmul.mubr.bf16.gmra.mrb[0].mxu0 %v1446
        %v1503 = vpop.f32.mrb[0].mxu0
        %v1504 = vadd.f32 %v1436, %v1503
        %v1505 = vpop.f32.mrb[0].mxu0
        %v1506 = vpop.f32.mrb[0].mxu0
        %v1507 = vadd.f32 %v1436, %v1506
        %v1508 = vpop.f32.mrb[0].mxu0
        %1509 = vmatprep.mubr.bf16.mxu0 0
        %1510 = vmatmul.mubr.bf16.gmra.mrb[0].mxu0 %v1449
        %v1511 = vpop.f32.mrb[0].mxu0
        %v1512 = vadd.f32 %v1436, %v1511
        %v1513 = vpop.f32.mrb[0].mxu0
        %v1514 = vpop.f32.mrb[0].mxu0
        %v1515 = vadd.f32 %v1436, %v1514
        %v1516 = vpop.f32.mrb[0].mxu0
        %1517 = vmatprep.mubr.bf16.mxu0 0
        %1518 = vmatmul.mubr.bf16.gmra.mrb[0].mxu0 %v1452
        %v1519 = vpop.f32.mrb[0].mxu0
        %v1520 = vadd.f32 %v1436, %v1519
        %v1521 = vpop.f32.mrb[0].mxu0
        %v1522 = vpop.f32.mrb[0].mxu0
        %v1523 = vadd.f32 %v1436, %v1522
        %v1524 = vpop.f32.mrb[0].mxu0
        %1525 = vmatprep.mubr.bf16.mxu0 0
        %1526 = vmatmul.mubr.bf16.gmra.mrb[0].mxu0 %v1455
        %v1527 = vpop.f32.mrb[0].mxu0
        %v1528 = vadd.f32 %v1436, %v1527
        %v1529 = vpop.f32.mrb[0].mxu0
        %v1530 = vpop.f32.mrb[0].mxu0
        %v1531 = vadd.f32 %v1436, %v1530
        %v1532 = vpop.f32.mrb[0].mxu0
        %1533 = vmatprep.mubr.bf16.mxu0 0
        %1534 = vmatmul.mubr.bf16.gmra.mrb[0].mxu0 %v1458
        %v1535 = vpop.f32.mrb[0].mxu0
        %v1536 = vadd.f32 %v1436, %v1535
        %v1537 = vpop.f32.mrb[0].mxu0
        %v1538 = vpop.f32.mrb[0].mxu0
        %v1539 = vadd.f32 %v1436, %v1538
        %v1540 = vpop.f32.mrb[0].mxu0
        %1541 = vmatprep.mubr.bf16.mxu0 0
        %1542 = vmatmul.mubr.bf16.gmra.mrb[0].mxu0 %v1461
        %v1543 = vpop.f32.mrb[0].mxu0
        %v1544 = vadd.f32 %v1436, %v1543
        %v1545 = vpop.f32.mrb[0].mxu0
        %v1546 = vpop.f32.mrb[0].mxu0
        %v1547 = vadd.f32 %v1436, %v1546
        %v1548 = vpop.f32.mrb[0].mxu0
        %1549 = vmatprep.mubr.bf16.mxu0 0
        %1550 = vmatmul.mubr.bf16.gmra.mrb[0].mxu0 %v1464
        %v1551 = vpop.f32.mrb[0].mxu0
        %v1552 = vadd.f32 %v1436, %v1551
        %v1553 = vpop.f32.mrb[0].mxu0
        %v1554 = vpop.f32.mrb[0].mxu0
        %v1555 = vadd.f32 %v1436, %v1554
        %v1556 = vpop.f32.mrb[0].mxu0
        %1557 = vmatprep.mubr.bf16.mxu0 0
        %1558 = vmatmul.mubr.bf16.gmra.mrb[0].mxu0 %v1467
        %v1559 = vpop.f32.mrb[0].mxu0
        %v1560 = vadd.f32 %v1436, %v1559
        %v1561 = vpop.f32.mrb[0].mxu0
        %v1562 = vpop.f32.mrb[0].mxu0
        %v1563 = vadd.f32 %v1436, %v1562
        %v1564 = vpop.f32.mrb[0].mxu0
        %1565 = vdwg.mxu0
        %1566 = vst [vmem:[%s474] sm:$0xff] %v1504
        %1567 = vst [vmem:[%s474 + $0x8] sm:$0xff] %v1507
        %1568 = vst [vmem:[%s474 + $0x10] sm:$0xff] %v1512
        %1569 = vst [vmem:[%s474 + $0x18] sm:$0xff] %v1515
        %1570 = vst [vmem:[%s474 + $0x20] sm:$0xff] %v1520
        %1571 = vst [vmem:[%s474 + $0x28] sm:$0xff] %v1523
        %1572 = vst [vmem:[%s474 + $0x30] sm:$0xff] %v1528
        %1573 = vst [vmem:[%s474 + $0x38] sm:$0xff] %v1531
        %1574 = vst [vmem:[%s474 + $0x40] sm:$0xff] %v1536
        %1575 = vst [vmem:[%s474 + $0x48] sm:$0xff] %v1539
        %1576 = vst [vmem:[%s474 + $0x50] sm:$0xff] %v1544
        %1577 = vst [vmem:[%s474 + $0x58] sm:$0xff] %v1547
        %1578 = vst [vmem:[%s474 + $0x60] sm:$0xff] %v1552
        %1579 = vst [vmem:[%s474 + $0x68] sm:$0xff] %v1555
        %1580 = vst [vmem:[%s474 + $0x70] sm:$0xff] %v1560
        %1581 = vst [vmem:[%s474 + $0x78] sm:$0xff] %v1563
        %s1582 = sand.u32 %s315, 1
        %s1583 = scalar_lea.sflag [#allocation4], %s1582
        %s1584 = sand.u32 %s315, 1
        %s1585 = smul.addr %s1584, 128
        %s1586 = scalar_lea.vmem [#allocation8], %s1585
        // Predicated region
        $region85: #{tpu_custom_call.1} parent=71 // pred_check
          %p1587 = pneg %p325
        $region86: #{tpu_custom_call.1} parent=71 // pred_check_branch
          %1589 = sbr.rel (%p1587) target = $region88
        $region87: #{tpu_custom_call.1} parent=71 // pred_region
          %s1590 = smul.u32 16, %s29
          %s1592 = ssub.s32 2048, 2048
          %1593 = vsyncadd %s1583, %s1592
          %s1594 = smul.addr %s1590, 128
          %s1595 = scalar_lea.hbm %s13, %s1594
          %s1596 = sshll.u32 %s1586, 4
          %s1597 = int_to_ptr.vmem [resolvable:$true] %s1596
          %1602 = dma.vmem_to_hbm [thread:$0]  %s1597, 2048, %s1595, %s1583, 128, 128, 8
        $region88: #{tpu_custom_call.1} parent=71 // pred_fallthru
          _
      $region72: #{tpu_custom_call.1} parent=5 // pred_fallthru
        _
      %p1603 = scmp.le.s32.totalorder 2, %s24
      // Predicated region
      $region89: #{tpu_custom_call.1} parent=5 // pred_check
        %p1604 = pneg %p1603
      $region90: #{tpu_custom_call.1} parent=5 // pred_check_branch
        %1606 = sbr.rel (%p1604) target = $region92
      $region91: #{tpu_custom_call.1} parent=5 // pred_region
        %s1607 = ssub.s32 %s24, 2
        // Predicated region
        $region93: #{tpu_custom_call.1} parent=91 // pred_check
          %p1608 = pneg %p331
        $region94: #{tpu_custom_call.1} parent=91 // pred_check_branch
          %1610 = sbr.rel (%p1608) target = $region96
        $region95: #{tpu_custom_call.1} parent=91 // pred_region
          %s1611 = sand.u32 %s316, 1
          %s1612 = scalar_lea.sflag [#allocation4], %s1611
          %s1613 = sand.u32 %s316, 1
          %s1614 = smul.addr %s1613, 128
          %s1615 = scalar_lea.vmem [#allocation8], %s1614
          %1616 = dma.done %s1612, 2048
        $region96: #{tpu_custom_call.1} parent=91 // pred_fallthru
          _
      $region92: #{tpu_custom_call.1} parent=5 // pred_fallthru
        _
    $region6: #{tpu_custom_call.1} parent=1 // loop_footer
      %s28 = sadd.s32 1, %s24
    $region7: #{tpu_custom_call.1} parent=1 // loop_footer_branch
      %23 = sbr.rel target = $region3
    $region8: #{tpu_custom_call.1} parent=1 // loop_exit
      _
    %1617 = vsyncpa [#allocation3], 1
    %s1618 = scalar_lea.sflag [#allocation3], 1
    %1619 = vsyncpa %s1618, 1
    %1620 = vsyncpa [#allocation6], 1
    %1621 = vsyncpa [#allocation4], 1
    %s1622 = scalar_lea.sflag [#allocation4], 1
    %1623 = vsyncpa %s1622, 1

</llo_original>
